<compile_context>
chip_gen: v6e
topology: v6e:2x2x1
jax: 0.10.0
libtpu: 0.0.40
codegen_flags: <defaults>
</compile_context>

<pallas_src>
import numpy as np
import jax
import jax.numpy as jnp
from jax.experimental import pallas as pl
from jax.experimental.pallas import tpu as pltpu

# ----------------------------- configuration -----------------------------
NODE_FEATURES = 32
EDGE_FEATURES = 32
NUM_POS_EMB = 16          # num_positional_embeddings
NUM_RBF = 16
TOP_K = 30
D_MIN, D_MAX = 0.0, 20.0
D_SIGMA = (D_MAX - D_MIN) / NUM_RBF
EPS_NORM = 1e-6

EDGE_IN = NUM_POS_EMB + NUM_RBF + 7     # 39
OF_PAD = 8                              # orientation features zero-padded 7 -> 8
NODE_IN = 6 + 16                        # 22

# Lane tile of the flattened B*N*K (edge) / B*N (node) row axis.
TILE_MAX = 8192


def _round_up(x, m):
    return ((x + m - 1) // m) * m


# ----------------------------- JAX glue helpers -----------------------------
def l2norm(x, axis=-1, eps=1e-12):
    # matches torch.nn.functional.normalize (clamp_min on the norm)
    n = jnp.sqrt(jnp.sum(x * x, axis=axis, keepdims=True))
    return x / jnp.maximum(n, eps)


def gather_nodes(nodes, idx):
    # nodes [B, N, C], idx [B, N, K] -> [B, N, K, C]
    B, N, K = idx.shape
    flat = idx.reshape(B, N * K)
    out = jnp.take_along_axis(nodes, flat[..., None], axis=1)
    return out.reshape(B, N, K, nodes.shape[-1])


def compute_dist(X_ca, mask, top_k, eps=1e-6):
    # Pairwise euclidean distances via squared-norm expansion (single MXU matmul,
    # no [B, N, N, 3] displacement temporary) + k nearest neighbors.
    mask_2D = mask[:, None, :] * mask[:, :, None]                    # [B, N, N]
    sq = jnp.sum(X_ca * X_ca, axis=-1)                               # [B, N]
    xy = jnp.einsum('bnd,bmd->bnm', X_ca, X_ca)                      # [B, N, N]
    D2 = jnp.maximum(sq[:, :, None] + sq[:, None, :] - 2.0 * xy, 0.0)
    D = mask_2D * jnp.sqrt(D2 + eps)
    D_max = jnp.max(D, axis=-1, keepdims=True)
    D_adjust = D + (1.0 - mask_2D) * D_max
    k = min(top_k, X_ca.shape[1])
    neg_vals, E_idx = jax.lax.top_k(-D_adjust, k)                    # smallest-k
    return -neg_vals, E_idx                                          # [B,N,K], [B,N,K]


def quaternions(R):
    # R [..., 3, 3] -> Q [..., 4]
    diag = jnp.diagonal(R, axis1=-2, axis2=-1)                       # [..., 3]
    Rxx, Ryy, Rzz = diag[..., 0], diag[..., 1], diag[..., 2]
    magnitudes = 0.5 * jnp.sqrt(jnp.abs(
        1.0 + jnp.stack([Rxx - Ryy - Rzz, -Rxx + Ryy - Rzz, -Rxx - Ryy + Rzz], axis=-1)))
    signs = jnp.sign(jnp.stack([R[..., 2, 1] - R[..., 1, 2],
                                R[..., 0, 2] - R[..., 2, 0],
                                R[..., 1, 0] - R[..., 0, 1]], axis=-1))
    xyz = signs * magnitudes
    w = jnp.sqrt(jnp.maximum(1.0 + jnp.sum(diag, axis=-1, keepdims=True), 0.0)) / 2.0
    Q = jnp.concatenate([xyz, w], axis=-1)
    return l2norm(Q)


def orientations_coarse_T(X_ca, E_idx, eps=1e-6):
    # Returns the orientation features already stacked on a LEADING axis
    # (shape [8, B, N, K]: dU(3) + quaternion(4) + zero pad), so the wrapper can
    # feed the lane-dense transposed edge kernel without an extra relayout pass.
    B, N, _ = X_ca.shape
    dX = X_ca[:, 1:, :] - X_ca[:, :-1, :]
    U = l2norm(dX)
    u_2, u_1 = U[:, :-2], U[:, 1:-1]
    n_2 = l2norm(jnp.cross(u_2, u_1))
    o_1 = l2norm(u_2 - u_1)
    O = jnp.stack([o_1, n_2, jnp.cross(o_1, n_2)], axis=2)           # [B, N-3, 3, 3]
    O = O.reshape(B, N - 3, 9)
    O = jnp.pad(O, ((0, 0), (1, 2), (0, 0)))                         # [B, N, 9]
    O_neighbors = gather_nodes(O, E_idx)                             # [B, N, K, 9]
    X_neighbors = gather_nodes(X_ca, E_idx)                          # [B, N, K, 3]
    O = O.reshape(B, N, 3, 3)
    O_neighbors = O_neighbors.reshape(B, N, E_idx.shape[2], 3, 3)
    dXn = X_neighbors - X_ca[:, :, None, :]                          # [B, N, K, 3]
    dU = jnp.matmul(O[:, :, None], dXn[..., None])[..., 0]           # [B, N, K, 3]
    dU = l2norm(dU)
    R = jnp.matmul(jnp.swapaxes(O[:, :, None], -1, -2), O_neighbors)
    Q = quaternions(R)                                               # [B, N, K, 4]
    zero = jnp.zeros_like(dU[..., 0])
    return jnp.stack([dU[..., 0], dU[..., 1], dU[..., 2],
                      Q[..., 0], Q[..., 1], Q[..., 2], Q[..., 3], zero], axis=0)


def dihedral_angles(X, eps=1e-7):
    # X [B, N, 4, 3] -> angles D [B, N, 3]
    B, N = X.shape[0], X.shape[1]
    Xb = X[:, :, :3, :].reshape(B, 3 * N, 3)
    dX = Xb[:, 1:, :] - Xb[:, :-1, :]
    U = l2norm(dX)
    u_2, u_1, u_0 = U[:, :-2], U[:, 1:-1], U[:, 2:]
    n_2 = l2norm(jnp.cross(u_2, u_1))
    n_1 = l2norm(jnp.cross(u_1, u_0))
    cosD = jnp.clip(jnp.sum(n_2 * n_1, axis=-1), -1 + eps, 1 - eps)
    D = jnp.sign(jnp.sum(u_2 * n_1, axis=-1)) * jnp.arccos(cosD)
    D = jnp.pad(D, ((0, 0), (1, 2)))
    return D.reshape(B, N, 3)


# ----------------------------- Pallas kernels -----------------------------
def _edge_kernel(d_ref, dist_ref, of_ref,
                 wcos_ref, wsin_ref, wrbf_ref, wof_ref,
                 b_ref, g_ref, gb_ref, out_ref):
    # Transposed (lane-dense) layout: the flattened B*N*K index is the LANE axis.
    #   d_ref, dist_ref : (1, TILE)
    #   of_ref          : (8, TILE)       orientation features (7 real + 1 zero pad)
    #   wcos/wsin_ref   : (Ce, 8)
    #   wrbf_ref        : (Ce, 16)
    #   wof_ref         : (Ce, 8)
    #   b/g/gb_ref      : (Ce, 1)
    #   out_ref         : (Ce, TILE)
    d = d_ref[...]          # (1, TILE)  E_idx - i offsets (float)
    dist = dist_ref[...]    # (1, TILE)  neighbor distances

    # Positional frequencies / RBF centers are analytic -> bake in-kernel from an
    # iota instead of streaming two extra inputs through BlockSpecs.
    i_pos = jax.lax.broadcasted_iota(jnp.int32, (NUM_POS_EMB // 2, 1), 0).astype(jnp.float32)
    freq = jnp.exp(i_pos * (-2.0 * float(np.log(10000.0)) / NUM_POS_EMB))   # (8, 1)
    i_rbf = jax.lax.broadcasted_iota(jnp.int32, (NUM_RBF, 1), 0).astype(jnp.float32)
    d_mu = i_rbf * ((D_MAX - D_MIN) / (NUM_RBF - 1)) + D_MIN                # (16, 1)

    angles = freq * d                                   # (8, TILE)  sublane broadcast
    z = (dist - d_mu) * (1.0 / D_SIGMA)                 # (16, TILE)
    rbf = jnp.exp(-(z * z))                             # (16, TILE)

    # Fused edge_embedding: four small accumulating MXU contractions; no
    # concatenated (39, TILE) feature copy is materialized (store-slot relief).
    x = jnp.dot(wcos_ref[...], jnp.cos(angles), preferred_element_type=jnp.float32)
    x = x + jnp.dot(wsin_ref[...], jnp.sin(angles), preferred_element_type=jnp.float32)
    x = x + jnp.dot(wrbf_ref[...], rbf, preferred_element_type=jnp.float32)
    x = x + jnp.dot(wof_ref[...], of_ref[...], preferred_element_type=jnp.float32)
    x = x + b_ref[...]

    # Normalize over the channel axis 0 (torch: unbiased variance, eps added twice)
    C = x.shape[0]
    mu = jnp.mean(x, axis=0, keepdims=True)             # (1, TILE)
    xc = x - mu
    var = jnp.sum(xc * xc, axis=0, keepdims=True) * (1.0 / (C - 1))
    inv = 1.0 / (jnp.sqrt(var + EPS_NORM) + EPS_NORM)   # exact, for torch parity
    out_ref[...] = g_ref[...] * (xc * inv) + gb_ref[...]


def _node_kernel(feat_ref, w_ref, b_ref, g_ref, gb_ref, out_ref):
    # feat_ref: (22, TILE) = [cos(dih)(3) | sin(dih)(3) | chain_emb(16)] on sublanes,
    # flattened B*N on lanes.  w_ref: (Cv, 22).  out_ref: (Cv, TILE) lane-dense.
    x = jnp.dot(w_ref[...], feat_ref[...], preferred_element_type=jnp.float32) + b_ref[...]
    C = x.shape[0]
    mu = jnp.mean(x, axis=0, keepdims=True)
    xc = x - mu
    var = jnp.sum(xc * xc, axis=0, keepdims=True) * (1.0 / (C - 1))
    inv = 1.0 / (jnp.sqrt(var + EPS_NORM) + EPS_NORM)
    out_ref[...] = g_ref[...] * (xc * inv) + gb_ref[...]


# ----------------------------- wrapper -----------------------------
def protein_features_forward(X, L, mask, chain_labels, params,
                             return_transposed_edges=False):
    """ProteinFeatures.forward for features_type='full' (augment_eps=0, eval mode)."""
    B, N = X.shape[0], X.shape[1]
    X_ca = X[:, :, 1, :]

    # --- geometry glue (data-dependent indexing stays in JAX) ---
    D_neighbors, E_idx = compute_dist(X_ca, mask, TOP_K)
    K = E_idx.shape[2]
    O_features_T = orientations_coarse_T(X_ca, E_idx)       # [8, B, N, K]
    dih = dihedral_angles(X)                                 # [B, N, 3]

    Ce = params['w_cosT'].shape[0]
    Cv = params['w_vT'].shape[0]

    # --- edge path: flatten B*N*K onto a single lane-dense row axis ---
    BNK = B * N * K
    TILE = min(TILE_MAX, _round_up(BNK, 128))
    BNK_pad = _round_up(BNK, TILE)
    pad = BNK_pad - BNK

    ii = jnp.arange(N, dtype=jnp.float32)
    d_off = (E_idx.astype(jnp.float32) - ii[None, :, None]).reshape(1, BNK)
    dist = D_neighbors.reshape(1, BNK)
    ofeat_T = O_features_T.reshape(OF_PAD, BNK)
    if pad:
        d_off = jnp.pad(d_off, ((0, 0), (0, pad)))
        dist = jnp.pad(dist, ((0, 0), (0, pad)))
        ofeat_T = jnp.pad(ofeat_T, ((0, 0), (0, pad)))

    n_tiles = BNK_pad // TILE

    edge_in_specs = [
        pl.BlockSpec((1, TILE), lambda t: (0, t)),               # d_off
        pl.BlockSpec((1, TILE), lambda t: (0, t)),               # distances
        pl.BlockSpec((OF_PAD, TILE), lambda t: (0, t)),          # orientation features
        pl.BlockSpec((Ce, NUM_POS_EMB // 2), lambda t: (0, 0)),  # w_cos
        pl.BlockSpec((Ce, NUM_POS_EMB // 2), lambda t: (0, 0)),  # w_sin
        pl.BlockSpec((Ce, NUM_RBF), lambda t: (0, 0)),           # w_rbf
        pl.BlockSpec((Ce, OF_PAD), lambda t: (0, 0)),            # w_of
        pl.BlockSpec((Ce, 1), lambda t: (0, 0)),                 # bias
        pl.BlockSpec((Ce, 1), lambda t: (0, 0)),                 # norm gain
        pl.BlockSpec((Ce, 1), lambda t: (0, 0)),                 # norm bias
    ]
    E_T = pl.pallas_call(
        _edge_kernel,
        out_shape=jax.ShapeDtypeStruct((Ce, BNK_pad), jnp.float32),
        grid=(n_tiles,),
        in_specs=edge_in_specs,
        out_specs=pl.BlockSpec((Ce, TILE), lambda t: (0, t)),
        compiler_params=pltpu.CompilerParams(dimension_semantics=("parallel",)),
    )(d_off, dist, ofeat_T,
      params['w_cosT'], params['w_sinT'], params['w_rbfT'], params['w_ofT'],
      params['b_eT'], params['g_eT'], params['gb_eT'])

    # --- node path: flatten B*N onto the lane axis, same transposed layout ---
    BN = B * N
    TILE_N = min(TILE_MAX, _round_up(BN, 128))
    BN_pad = _round_up(BN, TILE_N)
    dih_T = jnp.moveaxis(dih, -1, 0).reshape(3, BN)                       # (3, BN)
    chain_T = jnp.moveaxis(params['chain_emb'][chain_labels], -1, 0).reshape(16, BN)
    node_feat_T = jnp.concatenate([jnp.cos(dih_T), jnp.sin(dih_T), chain_T], axis=0)
    if BN_pad != BN:
        node_feat_T = jnp.pad(node_feat_T, ((0, 0), (0, BN_pad - BN)))

    node_in_specs = [
        pl.BlockSpec((NODE_IN, TILE_N), lambda t: (0, t)),
        pl.BlockSpec((Cv, NODE_IN), lambda t: (0, 0)),
        pl.BlockSpec((Cv, 1), lambda t: (0, 0)),
        pl.BlockSpec((Cv, 1), lambda t: (0, 0)),
        pl.BlockSpec((Cv, 1), lambda t: (0, 0)),
    ]
    V_T = pl.pallas_call(
        _node_kernel,
        out_shape=jax.ShapeDtypeStruct((Cv, BN_pad), jnp.float32),
        grid=(BN_pad // TILE_N,),
        in_specs=node_in_specs,
        out_specs=pl.BlockSpec((Cv, TILE_N), lambda t: (0, t)),
        compiler_params=pltpu.CompilerParams(dimension_semantics=("parallel",)),
    )(node_feat_T, params['w_vT'], params['b_vT'], params['g_vT'], params['gb_vT'])

    V = jnp.transpose(V_T[:, :BN]).reshape(B, N, Cv)                      # tiny

    if return_transposed_edges:
        # Lane-dense [Ce, B, N, K] layout; consuming this downstream skips a full
        # extra HBM pass over the edge tensor.
        E = E_T[:, :BNK].reshape(Ce, B, N, K)
    else:
        # Reference [B, N, K, Ce] layout (one relayout pass).
        E = jnp.transpose(E_T[:, :BNK]).reshape(B, N, K, Ce)

    return V, E, E_idx


def init_params(key, node_features=NODE_FEATURES, edge_features=EDGE_FEATURES):
    ks = jax.random.split(key, 3)
    # nn.Linear-style weights: [out, in]
    w_node = 0.1 * jax.random.normal(ks[0], (node_features, NODE_IN), jnp.float32)
    w_edge = 0.1 * jax.random.normal(ks[1], (edge_features, EDGE_IN), jnp.float32)
    chain_emb = 0.1 * jax.random.normal(ks[2], (54, 16), jnp.float32)

    params = {
        # edge path (transposed layout, channels on sublanes); columns follow the
        # reference input-feature order [cos(8) | sin(8) | rbf(16) | ofeat(7)].
        'w_cosT': w_edge[:, 0:8],                                   # [Ce, 8]
        'w_sinT': w_edge[:, 8:16],                                  # [Ce, 8]
        'w_rbfT': w_edge[:, 16:32],                                 # [Ce, 16]
        'w_ofT': jnp.concatenate(
            [w_edge[:, 32:39], jnp.zeros((edge_features, 1), jnp.float32)], axis=1),  # [Ce, 8]
        'b_eT': jnp.zeros((edge_features, 1), jnp.float32),
        'g_eT': jnp.ones((edge_features, 1), jnp.float32),          # Normalize gain
        'gb_eT': jnp.zeros((edge_features, 1), jnp.float32),        # Normalize bias
        # node path (transposed layout over [cos(3) | sin(3) | chain(16)])
        'w_vT': w_node,                                             # [Cv, 22]
        'b_vT': jnp.zeros((node_features, 1), jnp.float32),
        'g_vT': jnp.ones((node_features, 1), jnp.float32),
        'gb_vT': jnp.zeros((node_features, 1), jnp.float32),
        'chain_emb': chain_emb,
    }
    return params


if __name__ == "__main__":
    key = jax.random.PRNGKey(0)
    kx, kc, kp = jax.random.split(key, 3)

    B, N = 2, 8
    X = jax.random.normal(kx, (B, N, 4, 3), jnp.float32) * 3.0   # [B, N, atoms, xyz]
    L = jnp.full((B,), N, jnp.int32)
    mask = jnp.ones((B, N), jnp.float32)
    chain_labels = jax.random.randint(kc, (B, N), 0, 54)

    params = init_params(kp)

    fwd = jax.jit(protein_features_forward)
    V, E, E_idx = fwd(X, L, mask, chain_labels, params)
    jax.block_until_ready((V, E, E_idx))

    K = min(TOP_K, N)
    assert V.shape == (B, N, NODE_FEATURES)
    assert E.shape == (B, N, K, EDGE_FEATURES)
    assert E_idx.shape == (B, N, K)
    assert bool(jnp.all(jnp.isfinite(V))) and bool(jnp.all(jnp.isfinite(E)))
    print("KERNEL_OK")
</pallas_src>

<mosaic_0001>
module attributes {stable_mosaic.version = 11 : i64} {
  func.func @_node_kernel(%arg0: i32, %arg1: memref<22x128xf32, #tpu.memory_space<vmem>>, %arg2: memref<32x22xf32, #tpu.memory_space<vmem>>, %arg3: memref<32x1xf32, #tpu.memory_space<vmem>>, %arg4: memref<32x1xf32, #tpu.memory_space<vmem>>, %arg5: memref<32x1xf32, #tpu.memory_space<vmem>>, %arg6: memref<32x128xf32, #tpu.memory_space<vmem>>) attributes {dimension_semantics = [#tpu.dimension_semantics<parallel>], iteration_bounds = array<i64: 1>, scalar_prefetch = 0 : i64, scratch_operands = 0 : i64, tpu.core_type = #tpu.core_type<tc>, window_params = [{transform_indices = @transform_0, window_bounds = array<i64: 22, 128>}, {pipeline_mode = #tpu.pipeline_mode<synchronous>, transform_indices = @transform_1, window_bounds = array<i64: 32, 22>}, {pipeline_mode = #tpu.pipeline_mode<synchronous>, transform_indices = @transform_2, window_bounds = array<i64: 32, 1>}, {pipeline_mode = #tpu.pipeline_mode<synchronous>, transform_indices = @transform_3, window_bounds = array<i64: 32, 1>}, {pipeline_mode = #tpu.pipeline_mode<synchronous>, transform_indices = @transform_4, window_bounds = array<i64: 32, 1>}, {transform_indices = @transform_5, window_bounds = array<i64: 32, 128>}]} {
    %c0 = arith.constant 0 : index
    %c0_0 = arith.constant 0 : index
    %0 = vector.load %arg2[%c0, %c0_0] : memref<32x22xf32, #tpu.memory_space<vmem>>, vector<32x22xf32>
    %c0_1 = arith.constant 0 : index
    %c0_2 = arith.constant 0 : index
    %1 = vector.load %arg1[%c0_1, %c0_2] : memref<22x128xf32, #tpu.memory_space<vmem>>, vector<22x128xf32>
    %cst = arith.constant dense<0.000000e+00> : vector<32x128xf32>
    %2 = tpu.matmul %0, %1, %cst {dimension_numbers = #tpu.dot_dimension_numbers<[1], [0], [0], [1], [0, 0, 1, 1], [], []>} : vector<32x22xf32>, vector<22x128xf32>, vector<32x128xf32> -> vector<32x128xf32>
    %c0_3 = arith.constant 0 : index
    %c0_4 = arith.constant 0 : index
    %3 = vector.load %arg3[%c0_3, %c0_4] : memref<32x1xf32, #tpu.memory_space<vmem>>, vector<32x1xf32>
    %4 = vector.broadcast %3 : vector<32x1xf32> to vector<32x128xf32>
    %5 = arith.addf %2, %4 : vector<32x128xf32>
    %cst_5 = arith.constant dense<0.000000e+00> : vector<128xf32>
    %6 = vector.multi_reduction <add>, %5, %cst_5 [0] : vector<32x128xf32> to vector<128xf32>
    %7 = vector.shape_cast %6 : vector<128xf32> to vector<1x128xf32>
    %cst_6 = arith.constant 3.200000e+01 : f32
    %8 = vector.broadcast %cst_6 : f32 to vector<1x128xf32>
    %9 = arith.divf %7, %8 : vector<1x128xf32>
    %10 = vector.broadcast %9 : vector<1x128xf32> to vector<32x128xf32>
    %11 = arith.subf %5, %10 : vector<32x128xf32>
    %12 = arith.mulf %11, %11 : vector<32x128xf32>
    %cst_7 = arith.constant dense<0.000000e+00> : vector<128xf32>
    %13 = vector.multi_reduction <add>, %12, %cst_7 [0] : vector<32x128xf32> to vector<128xf32>
    %14 = vector.shape_cast %13 : vector<128xf32> to vector<1x128xf32>
    %cst_8 = arith.constant 0.0322580636 : f32
    %15 = vector.broadcast %cst_8 : f32 to vector<1x128xf32>
    %16 = arith.mulf %14, %15 : vector<1x128xf32>
    %cst_9 = arith.constant 9.99999997E-7 : f32
    %17 = vector.broadcast %cst_9 : f32 to vector<1x128xf32>
    %18 = arith.addf %16, %17 : vector<1x128xf32>
    %19 = math.sqrt %18 : vector<1x128xf32>
    %cst_10 = arith.constant 9.99999997E-7 : f32
    %20 = vector.broadcast %cst_10 : f32 to vector<1x128xf32>
    %21 = arith.addf %19, %20 : vector<1x128xf32>
    %cst_11 = arith.constant 1.000000e+00 : f32
    %22 = vector.broadcast %cst_11 : f32 to vector<1x128xf32>
    %23 = arith.divf %22, %21 : vector<1x128xf32>
    %c0_12 = arith.constant 0 : index
    %c0_13 = arith.constant 0 : index
    %24 = vector.load %arg4[%c0_12, %c0_13] : memref<32x1xf32, #tpu.memory_space<vmem>>, vector<32x1xf32>
    %25 = vector.broadcast %23 : vector<1x128xf32> to vector<32x128xf32>
    %26 = arith.mulf %11, %25 : vector<32x128xf32>
    %27 = vector.broadcast %24 : vector<32x1xf32> to vector<32x128xf32>
    %28 = arith.mulf %27, %26 : vector<32x128xf32>
    %c0_14 = arith.constant 0 : index
    %c0_15 = arith.constant 0 : index
    %29 = vector.load %arg5[%c0_14, %c0_15] : memref<32x1xf32, #tpu.memory_space<vmem>>, vector<32x1xf32>
    %30 = vector.broadcast %29 : vector<32x1xf32> to vector<32x128xf32>
    %31 = arith.addf %28, %30 : vector<32x128xf32>
    %c0_16 = arith.constant 0 : index
    %c0_17 = arith.constant 0 : index
    %32 = vector.load %arg6[%c0_16, %c0_17] : memref<32x128xf32, #tpu.memory_space<vmem>>, vector<32x128xf32>
    tpu.vector_store %arg6[%c0_16, %c0_17], %31 {strides = array<i32>} : memref<32x128xf32, #tpu.memory_space<vmem>>, vector<32x128xf32>,
    return
  }
  func.func @transform_0(%arg0: i32) -> (i32, i32) {
    %c0_i32 = arith.constant 0 : i32
    %c0_i32_0 = arith.constant 0 : i32
    return %c0_i32, %arg0 : i32, i32
  }
  func.func @transform_1(%arg0: i32) -> (i32, i32) {
    %c0_i32 = arith.constant 0 : i32
    %c0_i32_0 = arith.constant 0 : i32
    %c0_i32_1 = arith.constant 0 : i32
    return %c0_i32, %c0_i32_0 : i32, i32
  }
  func.func @transform_2(%arg0: i32) -> (i32, i32) {
    %c0_i32 = arith.constant 0 : i32
    %c0_i32_0 = arith.constant 0 : i32
    %c0_i32_1 = arith.constant 0 : i32
    return %c0_i32, %c0_i32_0 : i32, i32
  }
  func.func @transform_3(%arg0: i32) -> (i32, i32) {
    %c0_i32 = arith.constant 0 : i32
    %c0_i32_0 = arith.constant 0 : i32
    %c0_i32_1 = arith.constant 0 : i32
    return %c0_i32, %c0_i32_0 : i32, i32
  }
  func.func @transform_4(%arg0: i32) -> (i32, i32) {
    %c0_i32 = arith.constant 0 : i32
    %c0_i32_0 = arith.constant 0 : i32
    %c0_i32_1 = arith.constant 0 : i32
    return %c0_i32, %c0_i32_0 : i32, i32
  }
  func.func @transform_5(%arg0: i32) -> (i32, i32) {
    %c0_i32 = arith.constant 0 : i32
    %c0_i32_0 = arith.constant 0 : i32
    return %c0_i32, %arg0 : i32, i32
  }
}

module attributes {stable_mosaic.version = 11 : i64} {
  func.func @_edge_kernel(%arg0: i32, %arg1: memref<1x128xf32, #tpu.memory_space<vmem>>, %arg2: memref<1x128xf32, #tpu.memory_space<vmem>>, %arg3: memref<8x128xf32, #tpu.memory_space<vmem>>, %arg4: memref<32x8xf32, #tpu.memory_space<vmem>>, %arg5: memref<32x8xf32, #tpu.memory_space<vmem>>, %arg6: memref<32x16xf32, #tpu.memory_space<vmem>>, %arg7: memref<32x8xf32, #tpu.memory_space<vmem>>, %arg8: memref<32x1xf32, #tpu.memory_space<vmem>>, %arg9: memref<32x1xf32, #tpu.memory_space<vmem>>, %arg10: memref<32x1xf32, #tpu.memory_space<vmem>>, %arg11: memref<32x128xf32, #tpu.memory_space<vmem>>) attributes {dimension_semantics = [#tpu.dimension_semantics<parallel>], iteration_bounds = array<i64: 1>, scalar_prefetch = 0 : i64, scratch_operands = 0 : i64, tpu.core_type = #tpu.core_type<tc>, window_params = [{transform_indices = @transform_0, window_bounds = array<i64: 1, 128>}, {transform_indices = @transform_1, window_bounds = array<i64: 1, 128>}, {transform_indices = @transform_2, window_bounds = array<i64: 8, 128>}, {pipeline_mode = #tpu.pipeline_mode<synchronous>, transform_indices = @transform_3, window_bounds = array<i64: 32, 8>}, {pipeline_mode = #tpu.pipeline_mode<synchronous>, transform_indices = @transform_4, window_bounds = array<i64: 32, 8>}, {pipeline_mode = #tpu.pipeline_mode<synchronous>, transform_indices = @transform_5, window_bounds = array<i64: 32, 16>}, {pipeline_mode = #tpu.pipeline_mode<synchronous>, transform_indices = @transform_6, window_bounds = array<i64: 32, 8>}, {pipeline_mode = #tpu.pipeline_mode<synchronous>, transform_indices = @transform_7, window_bounds = array<i64: 32, 1>}, {pipeline_mode = #tpu.pipeline_mode<synchronous>, transform_indices = @transform_8, window_bounds = array<i64: 32, 1>}, {pipeline_mode = #tpu.pipeline_mode<synchronous>, transform_indices = @transform_9, window_bounds = array<i64: 32, 1>}, {transform_indices = @transform_10, window_bounds = array<i64: 32, 128>}]} {
    %c0 = arith.constant 0 : index
    %c0_0 = arith.constant 0 : index
    %0 = vector.load %arg1[%c0, %c0_0] : memref<1x128xf32, #tpu.memory_space<vmem>>, vector<1x128xf32>
    %c0_1 = arith.constant 0 : index
    %c0_2 = arith.constant 0 : index
    %1 = vector.load %arg2[%c0_1, %c0_2] : memref<1x128xf32, #tpu.memory_space<vmem>>, vector<1x128xf32>
    %2 = tpu.iota {dimensions = array<i32: 0>} : vector<8x1xi32>
    %3 = arith.sitofp %2 : vector<8x1xi32> to vector<8x1xf32>
    %cst = arith.constant -1.15129256 : f32
    %4 = vector.broadcast %cst : f32 to vector<8x1xf32>
    %5 = arith.mulf %3, %4 : vector<8x1xf32>
    %6 = math.exp %5 : vector<8x1xf32>
    %7 = tpu.iota {dimensions = array<i32: 0>} : vector<16x1xi32>
    %8 = arith.sitofp %7 : vector<16x1xi32> to vector<16x1xf32>
    %cst_3 = arith.constant 1.33333337 : f32
    %9 = vector.broadcast %cst_3 : f32 to vector<16x1xf32>
    %10 = arith.mulf %8, %9 : vector<16x1xf32>
    %cst_4 = arith.constant 0.000000e+00 : f32
    %11 = vector.broadcast %cst_4 : f32 to vector<16x1xf32>
    %12 = arith.addf %10, %11 : vector<16x1xf32>
    %13 = vector.broadcast %6 : vector<8x1xf32> to vector<8x128xf32>
    %14 = vector.broadcast %0 : vector<1x128xf32> to vector<8x128xf32>
    %15 = arith.mulf %13, %14 : vector<8x128xf32>
    %16 = vector.broadcast %1 : vector<1x128xf32> to vector<16x128xf32>
    %17 = vector.broadcast %12 : vector<16x1xf32> to vector<16x128xf32>
    %18 = arith.subf %16, %17 : vector<16x128xf32>
    %cst_5 = arith.constant 8.000000e-01 : f32
    %19 = vector.broadcast %cst_5 : f32 to vector<16x128xf32>
    %20 = arith.mulf %18, %19 : vector<16x128xf32>
    %21 = arith.mulf %20, %20 : vector<16x128xf32>
    %cst_6 = arith.constant 0.000000e+00 : f32
    %22 = vector.broadcast %cst_6 : f32 to vector<16x128xf32>
    %23 = arith.subf %22, %21 : vector<16x128xf32>
    %24 = math.exp %23 : vector<16x128xf32>
    %c0_7 = arith.constant 0 : index
    %c0_8 = arith.constant 0 : index
    %25 = vector.load %arg4[%c0_7, %c0_8] : memref<32x8xf32, #tpu.memory_space<vmem>>, vector<32x8xf32>
    %26 = math.cos %15 : vector<8x128xf32>
    %cst_9 = arith.constant dense<0.000000e+00> : vector<32x128xf32>
    %27 = tpu.matmul %25, %26, %cst_9 {dimension_numbers = #tpu.dot_dimension_numbers<[1], [0], [0], [1], [0, 0, 1, 1], [], []>} : vector<32x8xf32>, vector<8x128xf32>, vector<32x128xf32> -> vector<32x128xf32>
    %c0_10 = arith.constant 0 : index
    %c0_11 = arith.constant 0 : index
    %28 = vector.load %arg5[%c0_10, %c0_11] : memref<32x8xf32, #tpu.memory_space<vmem>>, vector<32x8xf32>
    %29 = math.sin %15 : vector<8x128xf32>
    %cst_12 = arith.constant dense<0.000000e+00> : vector<32x128xf32>
    %30 = tpu.matmul %28, %29, %cst_12 {dimension_numbers = #tpu.dot_dimension_numbers<[1], [0], [0], [1], [0, 0, 1, 1], [], []>} : vector<32x8xf32>, vector<8x128xf32>, vector<32x128xf32> -> vector<32x128xf32>
    %31 = arith.addf %27, %30 : vector<32x128xf32>
    %c0_13 = arith.constant 0 : index
    %c0_14 = arith.constant 0 : index
    %32 = vector.load %arg6[%c0_13, %c0_14] : memref<32x16xf32, #tpu.memory_space<vmem>>, vector<32x16xf32>
    %cst_15 = arith.constant dense<0.000000e+00> : vector<32x128xf32>
    %33 = tpu.matmul %32, %24, %cst_15 {dimension_numbers = #tpu.dot_dimension_numbers<[1], [0], [0], [1], [0, 0, 1, 1], [], []>} : vector<32x16xf32>, vector<16x128xf32>, vector<32x128xf32> -> vector<32x128xf32>
    %34 = arith.addf %31, %33 : vector<32x128xf32>
    %c0_16 = arith.constant 0 : index
    %c0_17 = arith.constant 0 : index
    %35 = vector.load %arg7[%c0_16, %c0_17] : memref<32x8xf32, #tpu.memory_space<vmem>>, vector<32x8xf32>
    %c0_18 = arith.constant 0 : index
    %c0_19 = arith.constant 0 : index
    %36 = vector.load %arg3[%c0_18, %c0_19] : memref<8x128xf32, #tpu.memory_space<vmem>>, vector<8x128xf32>
    %cst_20 = arith.constant dense<0.000000e+00> : vector<32x128xf32>
    %37 = tpu.matmul %35, %36, %cst_20 {dimension_numbers = #tpu.dot_dimension_numbers<[1], [0], [0], [1], [0, 0, 1, 1], [], []>} : vector<32x8xf32>, vector<8x128xf32>, vector<32x128xf32> -> vector<32x128xf32>
    %38 = arith.addf %34, %37 : vector<32x128xf32>
    %c0_21 = arith.constant 0 : index
    %c0_22 = arith.constant 0 : index
    %39 = vector.load %arg8[%c0_21, %c0_22] : memref<32x1xf32, #tpu.memory_space<vmem>>, vector<32x1xf32>
    %40 = vector.broadcast %39 : vector<32x1xf32> to vector<32x128xf32>
    %41 = arith.addf %38, %40 : vector<32x128xf32>
    %cst_23 = arith.constant dense<0.000000e+00> : vector<128xf32>
    %42 = vector.multi_reduction <add>, %41, %cst_23 [0] : vector<32x128xf32> to vector<128xf32>
    %43 = vector.shape_cast %42 : vector<128xf32> to vector<1x128xf32>
    %cst_24 = arith.constant 3.200000e+01 : f32
    %44 = vector.broadcast %cst_24 : f32 to vector<1x128xf32>
    %45 = arith.divf %43, %44 : vector<1x128xf32>
    %46 = vector.broadcast %45 : vector<1x128xf32> to vector<32x128xf32>
    %47 = arith.subf %41, %46 : vector<32x128xf32>
    %48 = arith.mulf %47, %47 : vector<32x128xf32>
    %cst_25 = arith.constant dense<0.000000e+00> : vector<128xf32>
    %49 = vector.multi_reduction <add>, %48, %cst_25 [0] : vector<32x128xf32> to vector<128xf32>
    %50 = vector.shape_cast %49 : vector<128xf32> to vector<1x128xf32>
    %cst_26 = arith.constant 0.0322580636 : f32
    %51 = vector.broadcast %cst_26 : f32 to vector<1x128xf32>
    %52 = arith.mulf %50, %51 : vector<1x128xf32>
    %cst_27 = arith.constant 9.99999997E-7 : f32
    %53 = vector.broadcast %cst_27 : f32 to vector<1x128xf32>
    %54 = arith.addf %52, %53 : vector<1x128xf32>
    %55 = math.sqrt %54 : vector<1x128xf32>
    %cst_28 = arith.constant 9.99999997E-7 : f32
    %56 = vector.broadcast %cst_28 : f32 to vector<1x128xf32>
    %57 = arith.addf %55, %56 : vector<1x128xf32>
    %cst_29 = arith.constant 1.000000e+00 : f32
    %58 = vector.broadcast %cst_29 : f32 to vector<1x128xf32>
    %59 = arith.divf %58, %57 : vector<1x128xf32>
    %c0_30 = arith.constant 0 : index
    %c0_31 = arith.constant 0 : index
    %60 = vector.load %arg9[%c0_30, %c0_31] : memref<32x1xf32, #tpu.memory_space<vmem>>, vector<32x1xf32>
    %61 = vector.broadcast %59 : vector<1x128xf32> to vector<32x128xf32>
    %62 = arith.mulf %47, %61 : vector<32x128xf32>
    %63 = vector.broadcast %60 : vector<32x1xf32> to vector<32x128xf32>
    %64 = arith.mulf %63, %62 : vector<32x128xf32>
    %c0_32 = arith.constant 0 : index
    %c0_33 = arith.constant 0 : index
    %65 = vector.load %arg10[%c0_32, %c0_33] : memref<32x1xf32, #tpu.memory_space<vmem>>, vector<32x1xf32>
    %66 = vector.broadcast %65 : vector<32x1xf32> to vector<32x128xf32>
    %67 = arith.addf %64, %66 : vector<32x128xf32>
    %c0_34 = arith.constant 0 : index
    %c0_35 = arith.constant 0 : index
    %68 = vector.load %arg11[%c0_34, %c0_35] : memref<32x128xf32, #tpu.memory_space<vmem>>, vector<32x128xf32>
    tpu.vector_store %arg11[%c0_34, %c0_35], %67 {strides = array<i32>} : memref<32x128xf32, #tpu.memory_space<vmem>>, vector<32x128xf32>,
    return
  }
  func.func @transform_0(%arg0: i32) -> (i32, i32) {
    %c0_i32 = arith.constant 0 : i32
    %c0_i32_0 = arith.constant 0 : i32
    return %c0_i32, %arg0 : i32, i32
  }
  func.func @transform_1(%arg0: i32) -> (i32, i32) {
    %c0_i32 = arith.constant 0 : i32
    %c0_i32_0 = arith.constant 0 : i32
    return %c0_i32, %arg0 : i32, i32
  }
  func.func @transform_2(%arg0: i32) -> (i32, i32) {
    %c0_i32 = arith.constant 0 : i32
    %c0_i32_0 = arith.constant 0 : i32
    return %c0_i32, %arg0 : i32, i32
  }
  func.func @transform_3(%arg0: i32) -> (i32, i32) {
    %c0_i32 = arith.constant 0 : i32
    %c0_i32_0 = arith.constant 0 : i32
    %c0_i32_1 = arith.constant 0 : i32
    return %c0_i32, %c0_i32_0 : i32, i32
  }
  func.func @transform_4(%arg0: i32) -> (i32, i32) {
    %c0_i32 = arith.constant 0 : i32
    %c0_i32_0 = arith.constant 0 : i32
    %c0_i32_1 = arith.constant 0 : i32
    return %c0_i32, %c0_i32_0 : i32, i32
  }
  func.func @transform_5(%arg0: i32) -> (i32, i32) {
    %c0_i32 = arith.constant 0 : i32
    %c0_i32_0 = arith.constant 0 : i32
    %c0_i32_1 = arith.constant 0 : i32
    return %c0_i32, %c0_i32_0 : i32, i32
  }
  func.func @transform_6(%arg0: i32) -> (i32, i32) {
    %c0_i32 = arith.constant 0 : i32
    %c0_i32_0 = arith.constant 0 : i32
    %c0_i32_1 = arith.constant 0 : i32
    return %c0_i32, %c0_i32_0 : i32, i32
  }
  func.func @transform_7(%arg0: i32) -> (i32, i32) {
    %c0_i32 = arith.constant 0 : i32
    %c0_i32_0 = arith.constant 0 : i32
    %c0_i32_1 = arith.constant 0 : i32
    return %c0_i32, %c0_i32_0 : i32, i32
  }
  func.func @transform_8(%arg0: i32) -> (i32, i32) {
    %c0_i32 = arith.constant 0 : i32
    %c0_i32_0 = arith.constant 0 : i32
    %c0_i32_1 = arith.constant 0 : i32
    return %c0_i32, %c0_i32_0 : i32, i32
  }
  func.func @transform_9(%arg0: i32) -> (i32, i32) {
    %c0_i32 = arith.constant 0 : i32
    %c0_i32_0 = arith.constant 0 : i32
    %c0_i32_1 = arith.constant 0 : i32
    return %c0_i32, %c0_i32_0 : i32, i32
  }
  func.func @transform_10(%arg0: i32) -> (i32, i32) {
    %c0_i32 = arith.constant 0 : i32
    %c0_i32_0 = arith.constant 0 : i32
    return %c0_i32, %arg0 : i32, i32
  }
}

</mosaic_0001>

<llo_original>
// kernel: neg.5
$region0: #{neg.5}
  #allocation0 [shape = 's32[1]{0}', space=sflag, size = 0x4, scoped, tag = 'scoped memory for neg.5']
  %s0 = inlined_call_operand.vmem [shape: f32[2,8,8], index: 0, kind: input, shape index: {}]
  %s1 = inlined_call_operand.vmem [shape: f32[2,8,8], index: 1, kind: output, shape index: {}]
  %v2 = vld [vmem:[%s0] sm:$0xff]
  %3 = xla_tuple %v2
  %4 = xla_tuple %3
  %v5 = vxor.u32 %v2, 2147483648
  %6 = xla_tuple %v5
  %7 = vst [vmem:[%s1] sm:$0xff] %v5
  %s8 = scalar_lea.vmem %s0, 8
  %v9 = vld [vmem:[%s8] sm:$0xff]
  %10 = xla_tuple %v9
  %11 = xla_tuple %10
  %v12 = vxor.u32 %v9, 2147483648
  %13 = xla_tuple %v12
  %s14 = scalar_lea.vmem %s1, 8
  %15 = vst [vmem:[%s14] sm:$0xff] %v12

// kernel: protein_features_forward.3
$region0: #{protein_features_forward.3}
  #allocation0 [shape = 'u32[]', space=smem, size = 0x4, offset = 0x4, fixed_abs, tag = 'smem constant byte address 0x4 - core index']
  #allocation1 [shape = 'u32[144,128]{1,0:T(1,128)}', space=vmem, size = 0x12000, scoped, tag = 'internal scratch']
  %s0 = inlined_call_operand.vmem [shape: f32[22,128], index: 0, kind: input, shape index: {}]
  %s1 = inlined_call_operand.vmem [shape: f32[32,22], index: 1, kind: input, shape index: {}]
  %s2 = inlined_call_operand.vmem [shape: f32[32,1], index: 2, kind: input, shape index: {}]
  %s3 = inlined_call_operand.vmem [shape: f32[32,1], index: 3, kind: input, shape index: {}]
  %s4 = inlined_call_operand.vmem [shape: f32[32,1], index: 4, kind: input, shape index: {}]
  %s5 = inlined_call_operand.vmem [shape: f32[32,128], index: 5, kind: output, shape index: {}]
  %s6 = sld [smem:[#allocation0]]
  $region30: #{protein_features_forward.3} parent=0
    _
  %s8 = ssub.s32 1, %s6
  %s9 = scalar_select 0, %s8, %s6
  // Predicated region
  $region2: #{protein_features_forward.3} parent=0 // pred_check
    _
  $region3: #{protein_features_forward.3} parent=0 // pred_check_branch
    %11 = sbr.rel (0) target = $region5
  $region4: #{protein_features_forward.3} parent=0 // pred_region
    _
  $region5: #{protein_features_forward.3} parent=0 // pred_fallthru
    _
  // Predicated region
  $region6: #{protein_features_forward.3} parent=0 // pred_check
    _
  $region7: #{protein_features_forward.3} parent=0 // pred_check_branch
    %13 = sbr.rel (0) target = $region9
  $region8: #{protein_features_forward.3} parent=0 // pred_region
    _
  $region9: #{protein_features_forward.3} parent=0 // pred_fallthru
    _
  // Predicated region
  $region10: #{protein_features_forward.3} parent=0 // pred_check
    _
  $region11: #{protein_features_forward.3} parent=0 // pred_check_branch
    %15 = sbr.rel (0) target = $region13
  $region12: #{protein_features_forward.3} parent=0 // pred_region
    _
  $region13: #{protein_features_forward.3} parent=0 // pred_fallthru
    _
  // Predicated region
  $region14: #{protein_features_forward.3} parent=0 // pred_check
    _
  $region15: #{protein_features_forward.3} parent=0 // pred_check_branch
    %17 = sbr.rel (0) target = $region17
  $region16: #{protein_features_forward.3} parent=0 // pred_region
    _
  $region17: #{protein_features_forward.3} parent=0 // pred_fallthru
    _
  // Predicated region
  $region18: #{protein_features_forward.3} parent=0 // pred_check
    _
  $region19: #{protein_features_forward.3} parent=0 // pred_check_branch
    %19 = sbr.rel (0) target = $region21
  $region20: #{protein_features_forward.3} parent=0 // pred_region
    _
  $region21: #{protein_features_forward.3} parent=0 // pred_fallthru
    _
  %v20 = vld [vmem:[%s1] sm:$0xff]
  %v21 = vld [vmem:[%s1 + $0x8] sm:$0xff]
  %v22 = vld [vmem:[%s1 + $0x10] sm:$0xff]
  %v23 = vld [vmem:[%s1 + $0x18] sm:$0xff]
  %v24 = vld [vmem:[%s0] sm:$0xff]
  %v25 = vld [vmem:[%s0 + $0x8] sm:$0xff]
  %v26 = vld [vmem:[%s0 + $0x10] sm:$0x3f]
  %v27 = vld [vmem:[%s2] sm:$0xff]
  %v28 = vld [vmem:[%s2 + $0x8] sm:$0xff]
  %v29 = vld [vmem:[%s2 + $0x10] sm:$0xff]
  %v30 = vld [vmem:[%s2 + $0x18] sm:$0xff]
  %32 = vset.pattern.permute.xlu0 0
  %33 = vperm.xlu0 %32, %v27
  %v34 = vpop.permute.xlu0 %33
  %37 = vset.pattern.permute.xlu0 0
  %38 = vperm.xlu0 %37, %v28
  %v39 = vpop.permute.xlu0 %38
  %42 = vset.pattern.permute.xlu0 0
  %43 = vperm.xlu0 %42, %v29
  %v44 = vpop.permute.xlu0 %43
  %47 = vset.pattern.permute.xlu0 0
  %48 = vperm.xlu0 %47, %v30
  %v49 = vpop.permute.xlu0 %48
  %vm51 = vcmask 179200
  %v53 = vsel %vm51, %v20, 0
  %v56 = vsel %vm51, %v21, 0
  %v59 = vsel %vm51, %v22, 0
  %v62 = vsel %vm51, %v23, 0
  %vm64 = vcmask 1045504
  %v66 = vsel %vm64, %v26, 0
  %68 = vmatprep.subr.mxu0 0.0
  %69 = vmatpush1.msra.mxu0 0.0
  %70 = vmatprep.subr.mxu0 0.0
  %71 = vmatpush1.msra.mxu0 0.0
  %72 = vmatprep.subr.mxu0 0.0
  %73 = vmatpush1.msra.mxu0 0.0
  %74 = vmatprep.subr.mxu0 0.0
  %75 = vmatpush1.msra.mxu0 0.0
  %76 = vmatprep.subr.mxu0 0.0
  %77 = vmatpush1.msra.mxu0 0.0
  %78 = vmatprep.subr.mxu0 0.0
  %79 = vmatpush1.msra.mxu0 0.0
  %80 = vmatprep.subr.mxu0 0.0
  %81 = vmatpush1.msra.mxu0 0.0
  %82 = vmatprep.subr.mxu0 0.0
  %83 = vmatpush1.msra.mxu0 0.0
  %84 = vmatprep.subr.mxu0 0.0
  %85 = vmatpush1.msra.mxu0 0.0
  %86 = vmatprep.subr.mxu0 0.0
  %87 = vmatpush1.msra.mxu0 0.0
  %88 = vmatprep.subr.mxu0 0.0
  %89 = vmatpush1.msra.mxu0 0.0
  %90 = vmatprep.subr.mxu0 0.0
  %91 = vmatpush1.msra.mxu0 0.0
  %92 = vmatprep.subr.mxu0 0.0
  %93 = vmatpush1.msra.mxu0 0.0
  %94 = vmatprep.subr.mxu0 0.0
  %95 = vmatpush1.msra.mxu0 %v66
  %96 = vmatprep.subr.mxu0 0.0
  %97 = vmatpush1.msra.mxu0 %v25
  %98 = vmatprep.subr.mxu0 0.0
  %99 = vmatpush1.msra.mxu0 %v24
  %100 = vmatprep.subr.mxu0 0.0
  %101 = vmatpush2.msra.mxu0 0.0
  %102 = vmatprep.subr.mxu0 0.0
  %103 = vmatpush2.msra.mxu0 0.0
  %104 = vmatprep.subr.mxu0 0.0
  %105 = vmatpush2.msra.mxu0 0.0
  %106 = vmatprep.subr.mxu0 0.0
  %107 = vmatpush2.msra.mxu0 0.0
  %108 = vmatprep.subr.mxu0 0.0
  %109 = vmatpush2.msra.mxu0 0.0
  %110 = vmatprep.subr.mxu0 0.0
  %111 = vmatpush2.msra.mxu0 0.0
  %112 = vmatprep.subr.mxu0 0.0
  %113 = vmatpush2.msra.mxu0 0.0
  %114 = vmatprep.subr.mxu0 0.0
  %115 = vmatpush2.msra.mxu0 0.0
  %116 = vmatprep.subr.mxu0 0.0
  %117 = vmatpush2.msra.mxu0 0.0
  %118 = vmatprep.subr.mxu0 0.0
  %119 = vmatpush2.msra.mxu0 0.0
  %120 = vmatprep.subr.mxu0 0.0
  %121 = vmatpush2.msra.mxu0 0.0
  %122 = vmatprep.subr.mxu0 0.0
  %123 = vmatpush2.msra.mxu0 0.0
  %124 = vmatprep.subr.mxu0 0.0
  %125 = vmatpush2.msra.mxu0 0.0
  %126 = vmatprep.subr.mxu0 0.0
  %127 = vmatpush2.msra.mxu0 0.0
  %128 = vmatprep.subr.mxu0 0.0
  %129 = vmatpush2.msra.mxu0 0.0
  %130 = vmatprep.subr.mxu0 0.0
  %131 = vmatpush2.msra.mxu0 0.0
  %132 = vmatprep.mubr.f32.mxu0 0.0
  %133 = vmatmul.mubr.f32.gmra.mxu0 %v53
  %v134 = vpop.f32.mrf.mxu0
  %v135 = vadd.f32 %v34, %v134
  %v136 = vpop.f32.mrf.mxu0
  %137 = vmatprep.mubr.f32.mxu0 0.0
  %138 = vmatmul.mubr.f32.gmra.mxu0 %v56
  %v139 = vpop.f32.mrf.mxu0
  %v140 = vadd.f32 %v39, %v139
  %v141 = vpop.f32.mrf.mxu0
  %142 = vmatprep.mubr.f32.mxu0 0.0
  %143 = vmatmul.mubr.f32.gmra.mxu0 %v59
  %v144 = vpop.f32.mrf.mxu0
  %v145 = vadd.f32 %v44, %v144
  %v146 = vpop.f32.mrf.mxu0
  %147 = vmatprep.mubr.f32.mxu0 0.0
  %148 = vmatmul.mubr.f32.gmra.mxu0 %v62
  %v149 = vpop.f32.mrf.mxu0
  %v150 = vadd.f32 %v49, %v149
  %v151 = vpop.f32.mrf.mxu0
  %152 = vdwg.mxu0
  %v153 = vadd.f32 %v135, %v140
  %v154 = vadd.f32 %v153, %v145
  %v155 = vadd.f32 %v154, %v150
  %v156 = vrot.slane %v155, 4
  %v157 = vadd.f32 %v155, %v156
  %v158 = vrot.slane %v157, 2
  %v159 = vadd.f32 %v157, %v158
  %v160 = vrot.slane %v159, 1
  %v161 = vadd.f32 %v159, %v160
  %v162 = vrcp.pop 32.0
  %v163 = vmul.f32 %v161, %v162
  %v164 = vsub.f32 %v135, %v163
  %v165 = vsub.f32 %v140, %v163
  %v166 = vsub.f32 %v145, %v163
  %v167 = vsub.f32 %v150, %v163
  %v168 = vmul.f32 %v164, %v164
  %v169 = vmul.f32 %v165, %v165
  %v170 = vmul.f32 %v166, %v166
  %v171 = vmul.f32 %v167, %v167
  %v172 = vadd.f32 %v168, %v169
  %v173 = vadd.f32 %v172, %v170
  %v174 = vadd.f32 %v173, %v171
  %v175 = vrot.slane %v174, 4
  %v176 = vadd.f32 %v174, %v175
  %v177 = vrot.slane %v176, 2
  %v178 = vadd.f32 %v176, %v177
  %v179 = vrot.slane %v178, 1
  %v180 = vadd.f32 %v178, %v179
  %v181 = vmul.f32 %v180, 0.032258064
  %v182 = vadd.f32 %v181, 1e-06
  %v183 = vrsqrt.pop %v182
  %v184 = vmul.f32 %v182, %v183
  %vm185 = vcmp.eq.f32.partialorder %v182, inf
  %v186 = vsel %vm185, %v182, %v184
  %vm187 = vcmp.eq.f32.partialorder %v182, 0.0
  %v188 = vand.u32 %v182, 2147483648
  %v189 = vsel %vm187, %v188, %v186
  %v190 = vadd.f32 %v189, 1e-06
  %v191 = vrcp.pop %v190
  %v192 = vmul.f32 1.0, %v191
  %v193 = vld [vmem:[%s3] sm:$0xff]
  %v194 = vld [vmem:[%s3 + $0x8] sm:$0xff]
  %v195 = vld [vmem:[%s3 + $0x10] sm:$0xff]
  %v196 = vld [vmem:[%s3 + $0x18] sm:$0xff]
  %v197 = vmul.f32 %v164, %v192
  %v198 = vmul.f32 %v165, %v192
  %v199 = vmul.f32 %v166, %v192
  %v200 = vmul.f32 %v167, %v192
  %202 = vset.pattern.permute.xlu0 0
  %203 = vperm.xlu0 %202, %v193
  %v204 = vpop.permute.xlu0 %203
  %207 = vset.pattern.permute.xlu0 0
  %208 = vperm.xlu0 %207, %v194
  %v209 = vpop.permute.xlu0 %208
  %212 = vset.pattern.permute.xlu0 0
  %213 = vperm.xlu0 %212, %v195
  %v214 = vpop.permute.xlu0 %213
  %217 = vset.pattern.permute.xlu0 0
  %218 = vperm.xlu0 %217, %v196
  %v219 = vpop.permute.xlu0 %218
  %v221 = vmul.f32 %v204, %v197
  %v222 = vmul.f32 %v209, %v198
  %v223 = vmul.f32 %v214, %v199
  %v224 = vmul.f32 %v219, %v200
  %v225 = vld [vmem:[%s4] sm:$0xff]
  %v226 = vld [vmem:[%s4 + $0x8] sm:$0xff]
  %v227 = vld [vmem:[%s4 + $0x10] sm:$0xff]
  %v228 = vld [vmem:[%s4 + $0x18] sm:$0xff]
  %230 = vset.pattern.permute.xlu0 0
  %231 = vperm.xlu0 %230, %v225
  %v232 = vpop.permute.xlu0 %231
  %235 = vset.pattern.permute.xlu0 0
  %236 = vperm.xlu0 %235, %v226
  %v237 = vpop.permute.xlu0 %236
  %240 = vset.pattern.permute.xlu0 0
  %241 = vperm.xlu0 %240, %v227
  %v242 = vpop.permute.xlu0 %241
  %245 = vset.pattern.permute.xlu0 0
  %246 = vperm.xlu0 %245, %v228
  %v247 = vpop.permute.xlu0 %246
  %v249 = vadd.f32 %v221, %v232
  %v250 = vadd.f32 %v222, %v237
  %v251 = vadd.f32 %v223, %v242
  %v252 = vadd.f32 %v224, %v247
  %253 = vst [vmem:[%s5] sm:$0xff] %v249
  %254 = vst [vmem:[%s5 + $0x8] sm:$0xff] %v250
  %255 = vst [vmem:[%s5 + $0x10] sm:$0xff] %v251
  %256 = vst [vmem:[%s5 + $0x18] sm:$0xff] %v252
  // Predicated region
  $region22: #{protein_features_forward.3} parent=0 // pred_check
    _
  $region23: #{protein_features_forward.3} parent=0 // pred_check_branch
    %258 = sbr.rel (0) target = $region25
  $region24: #{protein_features_forward.3} parent=0 // pred_region
    _
  $region25: #{protein_features_forward.3} parent=0 // pred_fallthru
    _
  // Predicated region
  $region26: #{protein_features_forward.3} parent=0 // pred_check
    _
  $region27: #{protein_features_forward.3} parent=0 // pred_check_branch
    %260 = sbr.rel (0) target = $region29
  $region28: #{protein_features_forward.3} parent=0 // pred_region
    _
  $region29: #{protein_features_forward.3} parent=0 // pred_fallthru
    _

// kernel: protein_features_forward.2
$region0: #{protein_features_forward.2}
  #allocation0 [shape = 'u32[]', space=smem, size = 0x4, offset = 0x4, fixed_abs, tag = 'smem constant byte address 0x4 - core index']
  #allocation1 [shape = 'u32[144,128]{1,0:T(1,128)}', space=vmem, size = 0x12000, scoped, tag = 'internal scratch']
  %s0 = inlined_call_operand.vmem [shape: f32[1,128], index: 0, kind: input, shape index: {}]
  %s1 = inlined_call_operand.vmem [shape: f32[1,128], index: 1, kind: input, shape index: {}]
  %s2 = inlined_call_operand.vmem [shape: f32[8,128], index: 2, kind: input, shape index: {}]
  %s3 = inlined_call_operand.vmem [shape: f32[32,8], index: 3, kind: input, shape index: {}]
  %s4 = inlined_call_operand.vmem [shape: f32[32,8], index: 4, kind: input, shape index: {}]
  %s5 = inlined_call_operand.vmem [shape: f32[32,16], index: 5, kind: input, shape index: {}]
  %s6 = inlined_call_operand.vmem [shape: f32[32,8], index: 6, kind: input, shape index: {}]
  %s7 = inlined_call_operand.vmem [shape: f32[32,1], index: 7, kind: input, shape index: {}]
  %s8 = inlined_call_operand.vmem [shape: f32[32,1], index: 8, kind: input, shape index: {}]
  %s9 = inlined_call_operand.vmem [shape: f32[32,1], index: 9, kind: input, shape index: {}]
  %s10 = inlined_call_operand.vmem [shape: f32[32,128], index: 10, kind: output, shape index: {}]
  %s11 = sld [smem:[#allocation0]]
  $region50: #{protein_features_forward.2} parent=0
    _
  %s13 = ssub.s32 1, %s11
  %s14 = scalar_select 0, %s13, %s11
  // Predicated region
  $region2: #{protein_features_forward.2} parent=0 // pred_check
    _
  $region3: #{protein_features_forward.2} parent=0 // pred_check_branch
    %16 = sbr.rel (0) target = $region5
  $region4: #{protein_features_forward.2} parent=0 // pred_region
    _
  $region5: #{protein_features_forward.2} parent=0 // pred_fallthru
    _
  // Predicated region
  $region6: #{protein_features_forward.2} parent=0 // pred_check
    _
  $region7: #{protein_features_forward.2} parent=0 // pred_check_branch
    %18 = sbr.rel (0) target = $region9
  $region8: #{protein_features_forward.2} parent=0 // pred_region
    _
  $region9: #{protein_features_forward.2} parent=0 // pred_fallthru
    _
  // Predicated region
  $region10: #{protein_features_forward.2} parent=0 // pred_check
    _
  $region11: #{protein_features_forward.2} parent=0 // pred_check_branch
    %20 = sbr.rel (0) target = $region13
  $region12: #{protein_features_forward.2} parent=0 // pred_region
    _
  $region13: #{protein_features_forward.2} parent=0 // pred_fallthru
    _
  // Predicated region
  $region14: #{protein_features_forward.2} parent=0 // pred_check
    _
  $region15: #{protein_features_forward.2} parent=0 // pred_check_branch
    %22 = sbr.rel (0) target = $region17
  $region16: #{protein_features_forward.2} parent=0 // pred_region
    _
  $region17: #{protein_features_forward.2} parent=0 // pred_fallthru
    _
  // Predicated region
  $region18: #{protein_features_forward.2} parent=0 // pred_check
    _
  $region19: #{protein_features_forward.2} parent=0 // pred_check_branch
    %24 = sbr.rel (0) target = $region21
  $region20: #{protein_features_forward.2} parent=0 // pred_region
    _
  $region21: #{protein_features_forward.2} parent=0 // pred_fallthru
    _
  // Predicated region
  $region22: #{protein_features_forward.2} parent=0 // pred_check
    _
  $region23: #{protein_features_forward.2} parent=0 // pred_check_branch
    %26 = sbr.rel (0) target = $region25
  $region24: #{protein_features_forward.2} parent=0 // pred_region
    _
  $region25: #{protein_features_forward.2} parent=0 // pred_fallthru
    _
  // Predicated region
  $region26: #{protein_features_forward.2} parent=0 // pred_check
    _
  $region27: #{protein_features_forward.2} parent=0 // pred_check_branch
    %28 = sbr.rel (0) target = $region29
  $region28: #{protein_features_forward.2} parent=0 // pred_region
    _
  $region29: #{protein_features_forward.2} parent=0 // pred_fallthru
    _
  // Predicated region
  $region30: #{protein_features_forward.2} parent=0 // pred_check
    _
  $region31: #{protein_features_forward.2} parent=0 // pred_check_branch
    %30 = sbr.rel (0) target = $region33
  $region32: #{protein_features_forward.2} parent=0 // pred_region
    _
  $region33: #{protein_features_forward.2} parent=0 // pred_fallthru
    _
  // Predicated region
  $region34: #{protein_features_forward.2} parent=0 // pred_check
    _
  $region35: #{protein_features_forward.2} parent=0 // pred_check_branch
    %32 = sbr.rel (0) target = $region37
  $region36: #{protein_features_forward.2} parent=0 // pred_region
    _
  $region37: #{protein_features_forward.2} parent=0 // pred_fallthru
    _
  // Predicated region
  $region38: #{protein_features_forward.2} parent=0 // pred_check
    _
  $region39: #{protein_features_forward.2} parent=0 // pred_check_branch
    %34 = sbr.rel (0) target = $region41
  $region40: #{protein_features_forward.2} parent=0 // pred_region
    _
  $region41: #{protein_features_forward.2} parent=0 // pred_fallthru
    _
  %v35 = vld [vmem:[%s0] sm:$0x1]
  %v36 = vld [vmem:[%s1] sm:$0x1]
  %v37 = vlaneseq
  %v38 = vshrl.u32 %v37, 7
  %v39 = vcvt.s32.f32 %v38
  %v40 = vmul.f32 %v39, -1.1512926
  %v41 = vmul.f32 %v40, 1.442695
  %v42 = vpow.pop %v41
  %v43 = vadd.s32 %v38, 8
  %v44 = vcvt.s32.f32 %v43
  %v45 = vmul.f32 %v39, 1.3333334
  %v46 = vmul.f32 %v44, 1.3333334
  %v47 = vadd.f32 %v45, 0.0
  %v48 = vadd.f32 %v46, 0.0
  %v50 = vlaneseq
  %v51 = vshrl.u32 %v50, 7
  %v52 = vsub.s32 0, %v51
  %v53 = vrot.slane %v35, %v52
  %v55 = vmul.f32 %v42, %v53
  %v57 = vlaneseq
  %v58 = vshrl.u32 %v57, 7
  %v59 = vsub.s32 0, %v58
  %v60 = vrot.slane %v36, %v59
  %v62 = vsub.f32 %v60, %v47
  %v63 = vsub.f32 %v60, %v48
  %v64 = vmul.f32 %v62, 0.8
  %v65 = vmul.f32 %v63, 0.8
  %v66 = vmul.f32 %v64, %v64
  %v67 = vmul.f32 %v65, %v65
  %v68 = vsub.f32 0.0, %v66
  %v69 = vsub.f32 0.0, %v67
  %v70 = vmul.f32 %v68, 1.442695
  %v71 = vpow.pop %v70
  %v72 = vmul.f32 %v69, 1.442695
  %v73 = vpow.pop %v72
  %v74 = vld [vmem:[%s3] sm:$0xff]
  %v75 = vld [vmem:[%s3 + $0x8] sm:$0xff]
  %v76 = vld [vmem:[%s3 + $0x10] sm:$0xff]
  %v77 = vld [vmem:[%s3 + $0x18] sm:$0xff]
  %v78 = vand.u32 2147483647, %v55
  %vm79 = vcmp.le.f32.partialorder %v78, 0.7853982
  %vm80 = vcmp.lt.s32.totalorder %v55, 0
  %v81 = vand.u32 %v55, 2139095040
  %v82 = vshrl.u32 %v81, 23
  %v83 = vsub.s32 %v82, 127
  %v84 = vand.u32 2147483647, %v55
  %v85 = vand.u32 %v84, 8388607
  %v86 = vor.u32 %v85, 8388608
  %v87 = vsub.s32 0, %v86
  %v88 = vadd.s32 %v83, 1
  %vm89 = vcmp.gt.s32.totalorder %v88, 0
  %v90 = vsel %vm89, %v88, 0
  %v91 = vshrl.u32 %v90, 5
  %v92 = vand.u32 %v90, 31
  %v93 = vsub.s32 32, %v92
  %v94 = vshrl.u32 683565275, %v93
  %v95 = vshll.u32 683565275, %v92
  %v96 = vshrl.u32 2475754826, %v93
  %v97 = vor.u32 %v95, %v96
  %v98 = vshll.u32 2475754826, %v92
  %v99 = vshrl.u32 2131351028, %v93
  %v100 = vor.u32 %v98, %v99
  %v101 = vshll.u32 2131351028, %v92
  %v102 = vshrl.u32 2102212464, %v93
  %v103 = vor.u32 %v101, %v102
  %v104 = vshll.u32 2102212464, %v92
  %v105 = vshrl.u32 920167782, %v93
  %v106 = vor.u32 %v104, %v105
  %v107 = vshll.u32 920167782, %v92
  %v108 = vshrl.u32 1326507024, %v93
  %v109 = vor.u32 %v107, %v108
  %vm110 = vcmp.lt.s32.totalorder %v91, 1
  %vm111 = vcmp.lt.s32.totalorder %v91, 2
  %vm112 = vcmp.lt.s32.totalorder %v91, 3
  %vm113 = vcmp.lt.s32.totalorder %v91, 4
  %v114 = vsel %vm110, %v94, %v97
  %v115 = vsel %vm113, %v103, 2102212464
  %v116 = vsel %vm112, %v100, %v115
  %v117 = vsel %vm111, %v114, %v116
  %v118 = vsel %vm110, %v97, %v100
  %v119 = vsel %vm113, %v106, 920167782
  %v120 = vsel %vm112, %v103, %v119
  %v121 = vsel %vm111, %v118, %v120
  %v122 = vsel %vm110, %v100, %v103
  %v123 = vsel %vm113, %v109, 1326507024
  %v124 = vsel %vm112, %v106, %v123
  %v125 = vsel %vm111, %v122, %v124
  %v126 = vshll.u32 %v86, 8
  %v127 = vmul.u32.u64.compose %v126, %v125
  %v128 = vextract.low.u32 %v127
  %v129 = vextract.high.u32 %v127
  %v130 = vmul.u32.u64.compose %v126, %v121
  %v131 = vextract.low.u32 %v130
  %v132 = vextract.high.u32 %v130
  %v133 = vmul.u32 %v126, %v117
  %v134 = vadd.s32 %v129, %v131
  %vm135 = vc.u32 %v129, %v131
  %v136 = vadd.s32 %v132, 1
  %v137 = vsel %vm135, %v136, %v132
  %v138 = vadd.s32 %v133, %v137
  %v139 = vadd.s32 %v138, 536870912
  %v140 = vshrl.u32 %v139, 30
  %v141 = vshll.u32 %v140, 30
  %v142 = vsub.s32 %v138, %v141
  %vm143 = vcmp.lt.s32.totalorder %v142, 0
  %v144 = vsub.s32 0, %v142
  %v145 = vsel %vm143, %v144, %v142
  %v146 = vclz %v145
  %v147 = vsub.s32 %v146, 2
  %vm148 = vcmp.gt.s32.totalorder 0, %v147
  %v149 = vsel %vm148, 0, %v147
  %v150 = vsub.s32 32, %v149
  %v151 = vshll.u32 %v142, %v149
  %v152 = vshrl.u32 %v134, %v150
  %v153 = vor.u32 %v151, %v152
  %v154 = vsub.s32 4294967266, %v149
  %v155 = vadd.s32 %v154, 127
  %v156 = vshll.u32 %v155, 23
  %v157 = vor.u32 4788187, %v156
  %v158 = vand.u32 2147483647, %v157
  %v160 = vcvt.s32.f32 %v153
  %v161 = vmul.f32 %v160, %v158
  %v162 = vxor.u32 %v161, 2147483648
  %v163 = vsel %vm80, %v162, %v161
  %v164 = vsub.s32 4, %v140
  %v165 = vsel %vm80, %v164, %v140
  %v166 = vsel %vm79, %v55, %v163
  %v167 = vsel %vm79, 0, %v165
  %v168 = vcosq.f32.pop %v166
  %v169 = vsinq.f32.pop %v166
  %vm170 = vweird.f32 %v55
  %v171 = vand.u32 %v167, 3
  %vm172 = vcmp.lt.s32.totalorder %v171, 2
  %vm173 = vcmp.eq.s32.totalorder %v171, 0
  %v174 = vxor.u32 %v169, 2147483648
  %v175 = vsel %vm173, %v168, %v174
  %vm176 = vcmp.eq.s32.totalorder %v171, 2
  %v177 = vxor.u32 %v168, 2147483648
  %v178 = vsel %vm176, %v177, %v169
  %v179 = vsel %vm172, %v175, %v178
  %v180 = vsel %vm170, nan, %v179
  %v181 = vld [vmem:[%s4] sm:$0xff]
  %v182 = vld [vmem:[%s4 + $0x8] sm:$0xff]
  %v183 = vld [vmem:[%s4 + $0x10] sm:$0xff]
  %v184 = vld [vmem:[%s4 + $0x18] sm:$0xff]
  %v185 = vand.u32 2147483647, %v55
  %vm186 = vcmp.le.f32.partialorder %v185, 0.7853982
  %vm187 = vcmp.lt.s32.totalorder %v55, 0
  %v188 = vand.u32 %v55, 2139095040
  %v189 = vshrl.u32 %v188, 23
  %v190 = vsub.s32 %v189, 127
  %v191 = vand.u32 2147483647, %v55
  %v192 = vand.u32 %v191, 8388607
  %v193 = vor.u32 %v192, 8388608
  %v194 = vsub.s32 0, %v193
  %v195 = vadd.s32 %v190, 1
  %vm196 = vcmp.gt.s32.totalorder %v195, 0
  %v197 = vsel %vm196, %v195, 0
  %v198 = vshrl.u32 %v197, 5
  %v199 = vand.u32 %v197, 31
  %v200 = vsub.s32 32, %v199
  %v201 = vshrl.u32 683565275, %v200
  %v202 = vshll.u32 683565275, %v199
  %v203 = vshrl.u32 2475754826, %v200
  %v204 = vor.u32 %v202, %v203
  %v205 = vshll.u32 2475754826, %v199
  %v206 = vshrl.u32 2131351028, %v200
  %v207 = vor.u32 %v205, %v206
  %v208 = vshll.u32 2131351028, %v199
  %v209 = vshrl.u32 2102212464, %v200
  %v210 = vor.u32 %v208, %v209
  %v211 = vshll.u32 2102212464, %v199
  %v212 = vshrl.u32 920167782, %v200
  %v213 = vor.u32 %v211, %v212
  %v214 = vshll.u32 920167782, %v199
  %v215 = vshrl.u32 1326507024, %v200
  %v216 = vor.u32 %v214, %v215
  %vm217 = vcmp.lt.s32.totalorder %v198, 1
  %vm218 = vcmp.lt.s32.totalorder %v198, 2
  %vm219 = vcmp.lt.s32.totalorder %v198, 3
  %vm220 = vcmp.lt.s32.totalorder %v198, 4
  %v221 = vsel %vm217, %v201, %v204
  %v222 = vsel %vm220, %v210, 2102212464
  %v223 = vsel %vm219, %v207, %v222
  %v224 = vsel %vm218, %v221, %v223
  %v225 = vsel %vm217, %v204, %v207
  %v226 = vsel %vm220, %v213, 920167782
  %v227 = vsel %vm219, %v210, %v226
  %v228 = vsel %vm218, %v225, %v227
  %v229 = vsel %vm217, %v207, %v210
  %v230 = vsel %vm220, %v216, 1326507024
  %v231 = vsel %vm219, %v213, %v230
  %v232 = vsel %vm218, %v229, %v231
  %v233 = vshll.u32 %v193, 8
  %v234 = vmul.u32.u64.compose %v233, %v232
  %v235 = vextract.low.u32 %v234
  %v236 = vextract.high.u32 %v234
  %v237 = vmul.u32.u64.compose %v233, %v228
  %v238 = vextract.low.u32 %v237
  %v239 = vextract.high.u32 %v237
  %v240 = vmul.u32 %v233, %v224
  %v241 = vadd.s32 %v236, %v238
  %vm242 = vc.u32 %v236, %v238
  %v243 = vadd.s32 %v239, 1
  %v244 = vsel %vm242, %v243, %v239
  %v245 = vadd.s32 %v240, %v244
  %v246 = vadd.s32 %v245, 536870912
  %v247 = vshrl.u32 %v246, 30
  %v248 = vshll.u32 %v247, 30
  %v249 = vsub.s32 %v245, %v248
  %vm250 = vcmp.lt.s32.totalorder %v249, 0
  %v251 = vsub.s32 0, %v249
  %v252 = vsel %vm250, %v251, %v249
  %v253 = vclz %v252
  %v254 = vsub.s32 %v253, 2
  %vm255 = vcmp.gt.s32.totalorder 0, %v254
  %v256 = vsel %vm255, 0, %v254
  %v257 = vsub.s32 32, %v256
  %v258 = vshll.u32 %v249, %v256
  %v259 = vshrl.u32 %v241, %v257
  %v260 = vor.u32 %v258, %v259
  %v261 = vsub.s32 4294967266, %v256
  %v262 = vadd.s32 %v261, 127
  %v263 = vshll.u32 %v262, 23
  %v264 = vor.u32 4788187, %v263
  %v265 = vand.u32 2147483647, %v264
  %v267 = vcvt.s32.f32 %v260
  %v268 = vmul.f32 %v267, %v265
  %v269 = vxor.u32 %v268, 2147483648
  %v270 = vsel %vm187, %v269, %v268
  %v271 = vsub.s32 4, %v247
  %v272 = vsel %vm187, %v271, %v247
  %v273 = vsel %vm186, %v55, %v270
  %v274 = vsel %vm186, 0, %v272
  %v275 = vcosq.f32.pop %v273
  %v276 = vsinq.f32.pop %v273
  %vm277 = vweird.f32 %v55
  %v278 = vadd.s32 %v274, 3
  %v279 = vand.u32 %v278, 3
  %vm280 = vcmp.lt.s32.totalorder %v279, 2
  %vm281 = vcmp.eq.s32.totalorder %v279, 0
  %v282 = vxor.u32 %v276, 2147483648
  %v283 = vsel %vm281, %v275, %v282
  %vm284 = vcmp.eq.s32.totalorder %v279, 2
  %v285 = vxor.u32 %v275, 2147483648
  %v286 = vsel %vm284, %v285, %v276
  %v287 = vsel %vm280, %v283, %v286
  %v288 = vsel %vm277, nan, %v287
  %vm289 = vcmask 64512
  %v291 = vsel %vm289, %v181, 0
  %v294 = vsel %vm289, %v182, 0
  %v297 = vsel %vm289, %v183, 0
  %v300 = vsel %vm289, %v184, 0
  %302 = vmatprep.subr.mxu0 0.0
  %303 = vmatpush1.msra.mxu0 0.0
  %304 = vmatprep.subr.mxu0 0.0
  %305 = vmatpush1.msra.mxu0 0.0
  %306 = vmatprep.subr.mxu0 0.0
  %307 = vmatpush1.msra.mxu0 0.0
  %308 = vmatprep.subr.mxu0 0.0
  %309 = vmatpush1.msra.mxu0 0.0
  %310 = vmatprep.subr.mxu0 0.0
  %311 = vmatpush1.msra.mxu0 0.0
  %312 = vmatprep.subr.mxu0 0.0
  %313 = vmatpush1.msra.mxu0 0.0
  %314 = vmatprep.subr.mxu0 0.0
  %315 = vmatpush1.msra.mxu0 0.0
  %316 = vmatprep.subr.mxu0 0.0
  %317 = vmatpush1.msra.mxu0 0.0
  %318 = vmatprep.subr.mxu0 0.0
  %319 = vmatpush1.msra.mxu0 0.0
  %320 = vmatprep.subr.mxu0 0.0
  %321 = vmatpush1.msra.mxu0 0.0
  %322 = vmatprep.subr.mxu0 0.0
  %323 = vmatpush1.msra.mxu0 0.0
  %324 = vmatprep.subr.mxu0 0.0
  %325 = vmatpush1.msra.mxu0 0.0
  %326 = vmatprep.subr.mxu0 0.0
  %327 = vmatpush1.msra.mxu0 0.0
  %328 = vmatprep.subr.mxu0 0.0
  %329 = vmatpush1.msra.mxu0 0.0
  %330 = vmatprep.subr.mxu0 0.0
  %331 = vmatpush1.msra.mxu0 0.0
  %332 = vmatprep.subr.mxu0 0.0
  %333 = vmatpush1.msra.mxu0 %v288
  %334 = vmatprep.subr.mxu0 0.0
  %335 = vmatpush2.msra.mxu0 0.0
  %336 = vmatprep.subr.mxu0 0.0
  %337 = vmatpush2.msra.mxu0 0.0
  %338 = vmatprep.subr.mxu0 0.0
  %339 = vmatpush2.msra.mxu0 0.0
  %340 = vmatprep.subr.mxu0 0.0
  %341 = vmatpush2.msra.mxu0 0.0
  %342 = vmatprep.subr.mxu0 0.0
  %343 = vmatpush2.msra.mxu0 0.0
  %344 = vmatprep.subr.mxu0 0.0
  %345 = vmatpush2.msra.mxu0 0.0
  %346 = vmatprep.subr.mxu0 0.0
  %347 = vmatpush2.msra.mxu0 0.0
  %348 = vmatprep.subr.mxu0 0.0
  %349 = vmatpush2.msra.mxu0 0.0
  %350 = vmatprep.subr.mxu0 0.0
  %351 = vmatpush2.msra.mxu0 0.0
  %352 = vmatprep.subr.mxu0 0.0
  %353 = vmatpush2.msra.mxu0 0.0
  %354 = vmatprep.subr.mxu0 0.0
  %355 = vmatpush2.msra.mxu0 0.0
  %356 = vmatprep.subr.mxu0 0.0
  %357 = vmatpush2.msra.mxu0 0.0
  %358 = vmatprep.subr.mxu0 0.0
  %359 = vmatpush2.msra.mxu0 0.0
  %360 = vmatprep.subr.mxu0 0.0
  %361 = vmatpush2.msra.mxu0 0.0
  %362 = vmatprep.subr.mxu0 0.0
  %363 = vmatpush2.msra.mxu0 0.0
  %364 = vmatprep.subr.mxu0 0.0
  %365 = vmatpush2.msra.mxu0 0.0
  %366 = vmatprep.mubr.f32.mxu0 0.0
  %367 = vmatmul.mubr.f32.gmra.mxu0 %v291
  %v368 = vpop.f32.mrf.mxu0
  %v369 = vadd.f32 0.0, %v368
  %v370 = vpop.f32.mrf.mxu0
  %371 = vmatprep.mubr.f32.mxu0 0.0
  %372 = vmatmul.mubr.f32.gmra.mxu0 %v294
  %v373 = vpop.f32.mrf.mxu0
  %v374 = vadd.f32 0.0, %v373
  %v375 = vpop.f32.mrf.mxu0
  %376 = vmatprep.mubr.f32.mxu0 0.0
  %377 = vmatmul.mubr.f32.gmra.mxu0 %v297
  %v378 = vpop.f32.mrf.mxu0
  %v379 = vadd.f32 0.0, %v378
  %v380 = vpop.f32.mrf.mxu0
  %381 = vmatprep.mubr.f32.mxu0 0.0
  %382 = vmatmul.mubr.f32.gmra.mxu0 %v300
  %v383 = vpop.f32.mrf.mxu0
  %v384 = vadd.f32 0.0, %v383
  %v385 = vpop.f32.mrf.mxu0
  %386 = vdwg.mxu0
  %v388 = vsel %vm289, %v74, 0
  %v391 = vsel %vm289, %v75, 0
  %v394 = vsel %vm289, %v76, 0
  %v397 = vsel %vm289, %v77, 0
  %399 = vmatprep.subr.mxu0 0.0
  %400 = vmatpush1.msra.mxu0 0.0
  %401 = vmatprep.subr.mxu0 0.0
  %402 = vmatpush1.msra.mxu0 0.0
  %403 = vmatprep.subr.mxu0 0.0
  %404 = vmatpush1.msra.mxu0 0.0
  %405 = vmatprep.subr.mxu0 0.0
  %406 = vmatpush1.msra.mxu0 0.0
  %407 = vmatprep.subr.mxu0 0.0
  %408 = vmatpush1.msra.mxu0 0.0
  %409 = vmatprep.subr.mxu0 0.0
  %410 = vmatpush1.msra.mxu0 0.0
  %411 = vmatprep.subr.mxu0 0.0
  %412 = vmatpush1.msra.mxu0 0.0
  %413 = vmatprep.subr.mxu0 0.0
  %414 = vmatpush1.msra.mxu0 0.0
  %415 = vmatprep.subr.mxu0 0.0
  %416 = vmatpush1.msra.mxu0 0.0
  %417 = vmatprep.subr.mxu0 0.0
  %418 = vmatpush1.msra.mxu0 0.0
  %419 = vmatprep.subr.mxu0 0.0
  %420 = vmatpush1.msra.mxu0 0.0
  %421 = vmatprep.subr.mxu0 0.0
  %422 = vmatpush1.msra.mxu0 0.0
  %423 = vmatprep.subr.mxu0 0.0
  %424 = vmatpush1.msra.mxu0 0.0
  %425 = vmatprep.subr.mxu0 0.0
  %426 = vmatpush1.msra.mxu0 0.0
  %427 = vmatprep.subr.mxu0 0.0
  %428 = vmatpush1.msra.mxu0 0.0
  %429 = vmatprep.subr.mxu0 0.0
  %430 = vmatpush1.msra.mxu0 %v180
  %431 = vmatprep.subr.mxu0 0.0
  %432 = vmatpush2.msra.mxu0 0.0
  %433 = vmatprep.subr.mxu0 0.0
  %434 = vmatpush2.msra.mxu0 0.0
  %435 = vmatprep.subr.mxu0 0.0
  %436 = vmatpush2.msra.mxu0 0.0
  %437 = vmatprep.subr.mxu0 0.0
  %438 = vmatpush2.msra.mxu0 0.0
  %439 = vmatprep.subr.mxu0 0.0
  %440 = vmatpush2.msra.mxu0 0.0
  %441 = vmatprep.subr.mxu0 0.0
  %442 = vmatpush2.msra.mxu0 0.0
  %443 = vmatprep.subr.mxu0 0.0
  %444 = vmatpush2.msra.mxu0 0.0
  %445 = vmatprep.subr.mxu0 0.0
  %446 = vmatpush2.msra.mxu0 0.0
  %447 = vmatprep.subr.mxu0 0.0
  %448 = vmatpush2.msra.mxu0 0.0
  %449 = vmatprep.subr.mxu0 0.0
  %450 = vmatpush2.msra.mxu0 0.0
  %451 = vmatprep.subr.mxu0 0.0
  %452 = vmatpush2.msra.mxu0 0.0
  %453 = vmatprep.subr.mxu0 0.0
  %454 = vmatpush2.msra.mxu0 0.0
  %455 = vmatprep.subr.mxu0 0.0
  %456 = vmatpush2.msra.mxu0 0.0
  %457 = vmatprep.subr.mxu0 0.0
  %458 = vmatpush2.msra.mxu0 0.0
  %459 = vmatprep.subr.mxu0 0.0
  %460 = vmatpush2.msra.mxu0 0.0
  %461 = vmatprep.subr.mxu0 0.0
  %462 = vmatpush2.msra.mxu0 0.0
  %463 = vmatprep.mubr.f32.mxu0 0.0
  %464 = vmatmul.mubr.f32.gmra.mxu0 %v388
  %v465 = vpop.f32.mrf.mxu0
  %v466 = vadd.f32 %v369, %v465
  %v467 = vpop.f32.mrf.mxu0
  %468 = vmatprep.mubr.f32.mxu0 0.0
  %469 = vmatmul.mubr.f32.gmra.mxu0 %v391
  %v470 = vpop.f32.mrf.mxu0
  %v471 = vadd.f32 %v374, %v470
  %v472 = vpop.f32.mrf.mxu0
  %473 = vmatprep.mubr.f32.mxu0 0.0
  %474 = vmatmul.mubr.f32.gmra.mxu0 %v394
  %v475 = vpop.f32.mrf.mxu0
  %v476 = vadd.f32 %v379, %v475
  %v477 = vpop.f32.mrf.mxu0
  %478 = vmatprep.mubr.f32.mxu0 0.0
  %479 = vmatmul.mubr.f32.gmra.mxu0 %v397
  %v480 = vpop.f32.mrf.mxu0
  %v481 = vadd.f32 %v384, %v480
  %v482 = vpop.f32.mrf.mxu0
  %483 = vdwg.mxu0
  %v484 = vld [vmem:[%s5] sm:$0xff]
  %v485 = vld [vmem:[%s5 + $0x8] sm:$0xff]
  %v486 = vld [vmem:[%s5 + $0x10] sm:$0xff]
  %v487 = vld [vmem:[%s5 + $0x18] sm:$0xff]
  %vm488 = vcmask 130048
  %v490 = vsel %vm488, %v484, 0
  %v493 = vsel %vm488, %v485, 0
  %v496 = vsel %vm488, %v486, 0
  %v499 = vsel %vm488, %v487, 0
  %501 = vmatprep.subr.mxu0 0.0
  %502 = vmatpush1.msra.mxu0 0.0
  %503 = vmatprep.subr.mxu0 0.0
  %504 = vmatpush1.msra.mxu0 0.0
  %505 = vmatprep.subr.mxu0 0.0
  %506 = vmatpush1.msra.mxu0 0.0
  %507 = vmatprep.subr.mxu0 0.0
  %508 = vmatpush1.msra.mxu0 0.0
  %509 = vmatprep.subr.mxu0 0.0
  %510 = vmatpush1.msra.mxu0 0.0
  %511 = vmatprep.subr.mxu0 0.0
  %512 = vmatpush1.msra.mxu0 0.0
  %513 = vmatprep.subr.mxu0 0.0
  %514 = vmatpush1.msra.mxu0 0.0
  %515 = vmatprep.subr.mxu0 0.0
  %516 = vmatpush1.msra.mxu0 0.0
  %517 = vmatprep.subr.mxu0 0.0
  %518 = vmatpush1.msra.mxu0 0.0
  %519 = vmatprep.subr.mxu0 0.0
  %520 = vmatpush1.msra.mxu0 0.0
  %521 = vmatprep.subr.mxu0 0.0
  %522 = vmatpush1.msra.mxu0 0.0
  %523 = vmatprep.subr.mxu0 0.0
  %524 = vmatpush1.msra.mxu0 0.0
  %525 = vmatprep.subr.mxu0 0.0
  %526 = vmatpush1.msra.mxu0 0.0
  %527 = vmatprep.subr.mxu0 0.0
  %528 = vmatpush1.msra.mxu0 0.0
  %529 = vmatprep.subr.mxu0 0.0
  %530 = vmatpush1.msra.mxu0 %v73
  %531 = vmatprep.subr.mxu0 0.0
  %532 = vmatpush1.msra.mxu0 %v71
  %533 = vmatprep.subr.mxu0 0.0
  %534 = vmatpush2.msra.mxu0 0.0
  %535 = vmatprep.subr.mxu0 0.0
  %536 = vmatpush2.msra.mxu0 0.0
  %537 = vmatprep.subr.mxu0 0.0
  %538 = vmatpush2.msra.mxu0 0.0
  %539 = vmatprep.subr.mxu0 0.0
  %540 = vmatpush2.msra.mxu0 0.0
  %541 = vmatprep.subr.mxu0 0.0
  %542 = vmatpush2.msra.mxu0 0.0
  %543 = vmatprep.subr.mxu0 0.0
  %544 = vmatpush2.msra.mxu0 0.0
  %545 = vmatprep.subr.mxu0 0.0
  %546 = vmatpush2.msra.mxu0 0.0
  %547 = vmatprep.subr.mxu0 0.0
  %548 = vmatpush2.msra.mxu0 0.0
  %549 = vmatprep.subr.mxu0 0.0
  %550 = vmatpush2.msra.mxu0 0.0
  %551 = vmatprep.subr.mxu0 0.0
  %552 = vmatpush2.msra.mxu0 0.0
  %553 = vmatprep.subr.mxu0 0.0
  %554 = vmatpush2.msra.mxu0 0.0
  %555 = vmatprep.subr.mxu0 0.0
  %556 = vmatpush2.msra.mxu0 0.0
  %557 = vmatprep.subr.mxu0 0.0
  %558 = vmatpush2.msra.mxu0 0.0
  %559 = vmatprep.subr.mxu0 0.0
  %560 = vmatpush2.msra.mxu0 0.0
  %561 = vmatprep.subr.mxu0 0.0
  %562 = vmatpush2.msra.mxu0 0.0
  %563 = vmatprep.subr.mxu0 0.0
  %564 = vmatpush2.msra.mxu0 0.0
  %565 = vmatprep.mubr.f32.mxu0 0.0
  %566 = vmatmul.mubr.f32.gmra.mxu0 %v490
  %v567 = vpop.f32.mrf.mxu0
  %v568 = vadd.f32 0.0, %v567
  %v569 = vpop.f32.mrf.mxu0
  %570 = vmatprep.mubr.f32.mxu0 0.0
  %571 = vmatmul.mubr.f32.gmra.mxu0 %v493
  %v572 = vpop.f32.mrf.mxu0
  %v573 = vadd.f32 0.0, %v572
  %v574 = vpop.f32.mrf.mxu0
  %575 = vmatprep.mubr.f32.mxu0 0.0
  %576 = vmatmul.mubr.f32.gmra.mxu0 %v496
  %v577 = vpop.f32.mrf.mxu0
  %v578 = vadd.f32 0.0, %v577
  %v579 = vpop.f32.mrf.mxu0
  %580 = vmatprep.mubr.f32.mxu0 0.0
  %581 = vmatmul.mubr.f32.gmra.mxu0 %v499
  %v582 = vpop.f32.mrf.mxu0
  %v583 = vadd.f32 0.0, %v582
  %v584 = vpop.f32.mrf.mxu0
  %585 = vdwg.mxu0
  %v586 = vadd.f32 %v466, %v568
  %v587 = vadd.f32 %v471, %v573
  %v588 = vadd.f32 %v476, %v578
  %v589 = vadd.f32 %v481, %v583
  %v590 = vld [vmem:[%s6] sm:$0xff]
  %v591 = vld [vmem:[%s6 + $0x8] sm:$0xff]
  %v592 = vld [vmem:[%s6 + $0x10] sm:$0xff]
  %v593 = vld [vmem:[%s6 + $0x18] sm:$0xff]
  %v594 = vld [vmem:[%s2] sm:$0xff]
  %v596 = vsel %vm289, %v590, 0
  %v599 = vsel %vm289, %v591, 0
  %v602 = vsel %vm289, %v592, 0
  %v605 = vsel %vm289, %v593, 0
  %607 = vmatprep.subr.mxu0 0.0
  %608 = vmatpush1.msra.mxu0 0.0
  %609 = vmatprep.subr.mxu0 0.0
  %610 = vmatpush1.msra.mxu0 0.0
  %611 = vmatprep.subr.mxu0 0.0
  %612 = vmatpush1.msra.mxu0 0.0
  %613 = vmatprep.subr.mxu0 0.0
  %614 = vmatpush1.msra.mxu0 0.0
  %615 = vmatprep.subr.mxu0 0.0
  %616 = vmatpush1.msra.mxu0 0.0
  %617 = vmatprep.subr.mxu0 0.0
  %618 = vmatpush1.msra.mxu0 0.0
  %619 = vmatprep.subr.mxu0 0.0
  %620 = vmatpush1.msra.mxu0 0.0
  %621 = vmatprep.subr.mxu0 0.0
  %622 = vmatpush1.msra.mxu0 0.0
  %623 = vmatprep.subr.mxu0 0.0
  %624 = vmatpush1.msra.mxu0 0.0
  %625 = vmatprep.subr.mxu0 0.0
  %626 = vmatpush1.msra.mxu0 0.0
  %627 = vmatprep.subr.mxu0 0.0
  %628 = vmatpush1.msra.mxu0 0.0
  %629 = vmatprep.subr.mxu0 0.0
  %630 = vmatpush1.msra.mxu0 0.0
  %631 = vmatprep.subr.mxu0 0.0
  %632 = vmatpush1.msra.mxu0 0.0
  %633 = vmatprep.subr.mxu0 0.0
  %634 = vmatpush1.msra.mxu0 0.0
  %635 = vmatprep.subr.mxu0 0.0
  %636 = vmatpush1.msra.mxu0 0.0
  %637 = vmatprep.subr.mxu0 0.0
  %638 = vmatpush1.msra.mxu0 %v594
  %639 = vmatprep.subr.mxu0 0.0
  %640 = vmatpush2.msra.mxu0 0.0
  %641 = vmatprep.subr.mxu0 0.0
  %642 = vmatpush2.msra.mxu0 0.0
  %643 = vmatprep.subr.mxu0 0.0
  %644 = vmatpush2.msra.mxu0 0.0
  %645 = vmatprep.subr.mxu0 0.0
  %646 = vmatpush2.msra.mxu0 0.0
  %647 = vmatprep.subr.mxu0 0.0
  %648 = vmatpush2.msra.mxu0 0.0
  %649 = vmatprep.subr.mxu0 0.0
  %650 = vmatpush2.msra.mxu0 0.0
  %651 = vmatprep.subr.mxu0 0.0
  %652 = vmatpush2.msra.mxu0 0.0
  %653 = vmatprep.subr.mxu0 0.0
  %654 = vmatpush2.msra.mxu0 0.0
  %655 = vmatprep.subr.mxu0 0.0
  %656 = vmatpush2.msra.mxu0 0.0
  %657 = vmatprep.subr.mxu0 0.0
  %658 = vmatpush2.msra.mxu0 0.0
  %659 = vmatprep.subr.mxu0 0.0
  %660 = vmatpush2.msra.mxu0 0.0
  %661 = vmatprep.subr.mxu0 0.0
  %662 = vmatpush2.msra.mxu0 0.0
  %663 = vmatprep.subr.mxu0 0.0
  %664 = vmatpush2.msra.mxu0 0.0
  %665 = vmatprep.subr.mxu0 0.0
  %666 = vmatpush2.msra.mxu0 0.0
  %667 = vmatprep.subr.mxu0 0.0
  %668 = vmatpush2.msra.mxu0 0.0
  %669 = vmatprep.subr.mxu0 0.0
  %670 = vmatpush2.msra.mxu0 0.0
  %671 = vmatprep.mubr.f32.mxu0 0.0
  %672 = vmatmul.mubr.f32.gmra.mxu0 %v596
  %v673 = vpop.f32.mrf.mxu0
  %v674 = vadd.f32 0.0, %v673
  %v675 = vpop.f32.mrf.mxu0
  %676 = vmatprep.mubr.f32.mxu0 0.0
  %677 = vmatmul.mubr.f32.gmra.mxu0 %v599
  %v678 = vpop.f32.mrf.mxu0
  %v679 = vadd.f32 0.0, %v678
  %v680 = vpop.f32.mrf.mxu0
  %681 = vmatprep.mubr.f32.mxu0 0.0
  %682 = vmatmul.mubr.f32.gmra.mxu0 %v602
  %v683 = vpop.f32.mrf.mxu0
  %v684 = vadd.f32 0.0, %v683
  %v685 = vpop.f32.mrf.mxu0
  %686 = vmatprep.mubr.f32.mxu0 0.0
  %687 = vmatmul.mubr.f32.gmra.mxu0 %v605
  %v688 = vpop.f32.mrf.mxu0
  %v689 = vadd.f32 0.0, %v688
  %v690 = vpop.f32.mrf.mxu0
  %691 = vdwg.mxu0
  %v692 = vadd.f32 %v586, %v674
  %v693 = vadd.f32 %v587, %v679
  %v694 = vadd.f32 %v588, %v684
  %v695 = vadd.f32 %v589, %v689
  %v696 = vld [vmem:[%s7] sm:$0xff]
  %v697 = vld [vmem:[%s7 + $0x8] sm:$0xff]
  %v698 = vld [vmem:[%s7 + $0x10] sm:$0xff]
  %v699 = vld [vmem:[%s7 + $0x18] sm:$0xff]
  %701 = vset.pattern.permute.xlu0 0
  %702 = vperm.xlu0 %701, %v696
  %v703 = vpop.permute.xlu0 %702
  %706 = vset.pattern.permute.xlu0 0
  %707 = vperm.xlu0 %706, %v697
  %v708 = vpop.permute.xlu0 %707
  %711 = vset.pattern.permute.xlu0 0
  %712 = vperm.xlu0 %711, %v698
  %v713 = vpop.permute.xlu0 %712
  %716 = vset.pattern.permute.xlu0 0
  %717 = vperm.xlu0 %716, %v699
  %v718 = vpop.permute.xlu0 %717
  %v720 = vadd.f32 %v692, %v703
  %v721 = vadd.f32 %v693, %v708
  %v722 = vadd.f32 %v694, %v713
  %v723 = vadd.f32 %v695, %v718
  %v724 = vadd.f32 %v720, %v721
  %v725 = vadd.f32 %v724, %v722
  %v726 = vadd.f32 %v725, %v723
  %v727 = vrot.slane %v726, 4
  %v728 = vadd.f32 %v726, %v727
  %v729 = vrot.slane %v728, 2
  %v730 = vadd.f32 %v728, %v729
  %v731 = vrot.slane %v730, 1
  %v732 = vadd.f32 %v730, %v731
  %v733 = vrcp.pop 32.0
  %v734 = vmul.f32 %v732, %v733
  %v735 = vsub.f32 %v720, %v734
  %v736 = vsub.f32 %v721, %v734
  %v737 = vsub.f32 %v722, %v734
  %v738 = vsub.f32 %v723, %v734
  %v739 = vmul.f32 %v735, %v735
  %v740 = vmul.f32 %v736, %v736
  %v741 = vmul.f32 %v737, %v737
  %v742 = vmul.f32 %v738, %v738
  %v743 = vadd.f32 %v739, %v740
  %v744 = vadd.f32 %v743, %v741
  %v745 = vadd.f32 %v744, %v742
  %v746 = vrot.slane %v745, 4
  %v747 = vadd.f32 %v745, %v746
  %v748 = vrot.slane %v747, 2
  %v749 = vadd.f32 %v747, %v748
  %v750 = vrot.slane %v749, 1
  %v751 = vadd.f32 %v749, %v750
  %v752 = vmul.f32 %v751, 0.032258064
  %v753 = vadd.f32 %v752, 1e-06
  %v754 = vrsqrt.pop %v753
  %v755 = vmul.f32 %v753, %v754
  %vm756 = vcmp.eq.f32.partialorder %v753, inf
  %v757 = vsel %vm756, %v753, %v755
  %vm758 = vcmp.eq.f32.partialorder %v753, 0.0
  %v759 = vand.u32 %v753, 2147483648
  %v760 = vsel %vm758, %v759, %v757
  %v761 = vadd.f32 %v760, 1e-06
  %v762 = vrcp.pop %v761
  %v763 = vmul.f32 1.0, %v762
  %v764 = vld [vmem:[%s8] sm:$0xff]
  %v765 = vld [vmem:[%s8 + $0x8] sm:$0xff]
  %v766 = vld [vmem:[%s8 + $0x10] sm:$0xff]
  %v767 = vld [vmem:[%s8 + $0x18] sm:$0xff]
  %v768 = vmul.f32 %v735, %v763
  %v769 = vmul.f32 %v736, %v763
  %v770 = vmul.f32 %v737, %v763
  %v771 = vmul.f32 %v738, %v763
  %773 = vset.pattern.permute.xlu0 0
  %774 = vperm.xlu0 %773, %v764
  %v775 = vpop.permute.xlu0 %774
  %778 = vset.pattern.permute.xlu0 0
  %779 = vperm.xlu0 %778, %v765
  %v780 = vpop.permute.xlu0 %779
  %783 = vset.pattern.permute.xlu0 0
  %784 = vperm.xlu0 %783, %v766
  %v785 = vpop.permute.xlu0 %784
  %788 = vset.pattern.permute.xlu0 0
  %789 = vperm.xlu0 %788, %v767
  %v790 = vpop.permute.xlu0 %789
  %v792 = vmul.f32 %v775, %v768
  %v793 = vmul.f32 %v780, %v769
  %v794 = vmul.f32 %v785, %v770
  %v795 = vmul.f32 %v790, %v771
  %v796 = vld [vmem:[%s9] sm:$0xff]
  %v797 = vld [vmem:[%s9 + $0x8] sm:$0xff]
  %v798 = vld [vmem:[%s9 + $0x10] sm:$0xff]
  %v799 = vld [vmem:[%s9 + $0x18] sm:$0xff]
  %801 = vset.pattern.permute.xlu0 0
  %802 = vperm.xlu0 %801, %v796
  %v803 = vpop.permute.xlu0 %802
  %806 = vset.pattern.permute.xlu0 0
  %807 = vperm.xlu0 %806, %v797
  %v808 = vpop.permute.xlu0 %807
  %811 = vset.pattern.permute.xlu0 0
  %812 = vperm.xlu0 %811, %v798
  %v813 = vpop.permute.xlu0 %812
  %816 = vset.pattern.permute.xlu0 0
  %817 = vperm.xlu0 %816, %v799
  %v818 = vpop.permute.xlu0 %817
  %v820 = vadd.f32 %v792, %v803
  %v821 = vadd.f32 %v793, %v808
  %v822 = vadd.f32 %v794, %v813
  %v823 = vadd.f32 %v795, %v818
  %824 = vst [vmem:[%s10] sm:$0xff] %v820
  %825 = vst [vmem:[%s10 + $0x8] sm:$0xff] %v821
  %826 = vst [vmem:[%s10 + $0x10] sm:$0xff] %v822
  %827 = vst [vmem:[%s10 + $0x18] sm:$0xff] %v823
  // Predicated region
  $region42: #{protein_features_forward.2} parent=0 // pred_check
    _
  $region43: #{protein_features_forward.2} parent=0 // pred_check_branch
    %829 = sbr.rel (0) target = $region45
  $region44: #{protein_features_forward.2} parent=0 // pred_region
    _
  $region45: #{protein_features_forward.2} parent=0 // pred_fallthru
    _
  // Predicated region
  $region46: #{protein_features_forward.2} parent=0 // pred_check
    _
  $region47: #{protein_features_forward.2} parent=0 // pred_check_branch
    %831 = sbr.rel (0) target = $region49
  $region48: #{protein_features_forward.2} parent=0 // pred_region
    _
  $region49: #{protein_features_forward.2} parent=0 // pred_fallthru
    _

</llo_original>
